<compile_context>
chip_gen: v5e
topology: v5e:2x2
jax: 0.10.0
libtpu: 0.0.40
codegen_flags: <defaults>
</compile_context>

<pallas_src>
import functools

import numpy as np
import jax
import jax.numpy as jnp
from jax.experimental import pallas as pl
from jax.experimental.pallas import tpu as pltpu


# bf16 inputs/weights/outputs with f32 MXU accumulation: ~2x MXU throughput
# and half the DMA volume on v6e/v7x; validation tolerance is 3e-2 below.
CONV_COMPUTE_DTYPE = jnp.bfloat16
LANE = 128
SUBLANE_BF16 = 16          # bf16 packs 16 rows per sublane group
# Max im2col rows per grid step.  VMEM/step ~ tile_m*K_pad*2B (x2 buffers)
# + tile_m*128*2B out (x2) + single-buffered weights: a few hundred KiB at
# these K, far under the 32 MiB scoped default on v5e/v6e/v7x.  On v5e/v6e
# (128 MiB VMEM) this could be raised to 1024 for large M; 512 also fits
# v7x's 64 MiB budget comfortably.
CONV_TILE_M = 512
UPSAMPLE_TILE_NC = 256


def _round_up(x, m):
    return ((x + m - 1) // m) * m


def _pick_tile_rows(n_rows, *, max_rows, align):
    """Row-tile size: `align`-aligned (16 for bf16 sublane packing), capped by
    a VMEM-derived max, and split so the 'parallel' grid has >= 2 steps when
    possible (keeps both v7x TensorCores busy)."""
    n_aligned = _round_up(max(n_rows, 1), align)
    tile = min(max_rows, n_aligned)
    if n_aligned > align and n_aligned <= tile:
        tile = max(align, _round_up(n_aligned // 2, align))
    return tile


def _resident_spec(block_shape):
    """Constant-index_map block: single-buffer it (halves its VMEM footprint;
    matters most under v7x's 64 MiB VMEM at real weight sizes)."""
    return pl.BlockSpec(block_shape, lambda *_: (0,) * len(block_shape),
                        pipeline_mode=pl.Buffered(1))


# ----------------------------------------------------------------------------
# Pallas kernels
# ----------------------------------------------------------------------------
def _conv_matmul_kernel(p_ref, w_ref, b_ref, o_ref, *, apply_relu):
    # p_ref: [tile_m, K_pad]     im2col patches (bf16, K_pad % 128 == 0)
    # w_ref: [K_pad, Cout_pad]   (bf16, resident single-buffered block)
    # b_ref: [1, Cout_pad]       (f32,  resident single-buffered block)
    # o_ref: [tile_m, Cout_pad]  (bf16, lane-dense: Cout_pad % 128 == 0)
    acc = jnp.dot(p_ref[...], w_ref[...], preferred_element_type=jnp.float32)
    acc = acc + b_ref[...]
    if apply_relu:
        acc = jnp.maximum(acc, 0.0)
    o_ref[...] = acc.astype(o_ref.dtype)


def _bilinear_sep_kernel(x_ref, bt_ref, a_ref, o_ref):
    # Separable bilinear upsample:
    #   out[b, ho, wo] = sum_{hi,wi} A[ho,hi] * x[b,hi,wi] * B[wo,wi]
    # done as two batched MXU matmuls (width pass, then height pass).
    # x_ref:  [tile_nc, Hi, Wi]  (bf16)
    # bt_ref: [Wi, Wo]           (bf16, resident)  == B^T
    # a_ref:  [Ho, Hi]           (bf16, resident)
    # o_ref:  [tile_nc, Ho, Wo]  (f32)
    b, hi, wi = x_ref.shape
    ho = a_ref.shape[0]
    wo = bt_ref.shape[1]
    x = x_ref[...]
    bt = jnp.broadcast_to(bt_ref[...][None], (b, wi, wo))
    t = jnp.einsum('bhw,bwq->bhq', x, bt,
                   preferred_element_type=jnp.float32)          # [b, Hi, Wo]
    a = jnp.broadcast_to(a_ref[...][None], (b, ho, hi))
    o = jnp.einsum('boh,bhq->boq', a, t.astype(x.dtype),
                   preferred_element_type=jnp.float32)          # [b, Ho, Wo]
    o_ref[...] = o.astype(o_ref.dtype)


# ----------------------------------------------------------------------------
# Conv wrapper (im2col / padding in plain JAX, matmul in Pallas)
# ----------------------------------------------------------------------------
def _im2col_nhwc(x_nhwc, kh, kw, stride, pad):
    # TODO(synk): fuse im2col into the conv kernel (halo-windowed input blocks
    # or pl.ANY + make_async_copy) to kill the kh*kw x HBM inflation at real
    # shapes; at these toy sizes the wrapper-side gather is negligible and it
    # fuses under the single jax.jit around the forward.
    N, H, W, C = x_nhwc.shape
    xp = jnp.pad(x_nhwc, ((0, 0), (pad, pad), (pad, pad), (0, 0)))
    Ho = (H + 2 * pad - kh) // stride + 1
    Wo = (W + 2 * pad - kw) // stride + 1
    cols = []
    for di in range(kh):
        for dj in range(kw):
            cols.append(xp[:, di:di + stride * Ho:stride,
                           dj:dj + stride * Wo:stride, :])
    patches = jnp.concatenate(cols, axis=-1)            # [N, Ho, Wo, kh*kw*C]
    return patches.reshape(N * Ho * Wo, kh * kw * C), (N, Ho, Wo)


def conv2d_nhwc_pallas(x_nhwc, weight, bias, *, stride=1, padding=1,
                       apply_relu=False):
    """PyTorch-semantics Conv2d (NHWC activations, OIHW weights) as an
    M-tiled Pallas MXU matmul.  Accepts an activation whose channel axis is
    already 128-lane zero-padded (weight is zero-padded along Cin to match)
    and returns an NHWC activation with the output channel axis zero-padded
    to a multiple of 128 (real channels are the first weight.shape[0])."""
    N, H, W, Cin_x = x_nhwc.shape
    Cout, Cin_w, kh, kw = weight.shape
    if Cin_x != Cin_w:
        # zero Cin columns contribute nothing to the matmul
        weight = jnp.pad(weight, ((0, 0), (0, Cin_x - Cin_w), (0, 0), (0, 0)))

    x_nhwc = x_nhwc.astype(CONV_COMPUTE_DTYPE)
    patches, (_, Ho, Wo) = _im2col_nhwc(x_nhwc, kh, kw, stride, padding)
    M, K = patches.shape
    K_pad = _round_up(K, LANE)
    Cout_pad = _round_up(Cout, LANE)

    # weight [Cout, Cin, kh, kw] -> [kh*kw*Cin, Cout] matching patch order,
    # zero-padded to [K_pad, Cout_pad] (lane-dense on both MXU axes).
    w_mat = jnp.transpose(weight, (2, 3, 1, 0)).reshape(K, Cout)
    w_mat = jnp.pad(w_mat, ((0, K_pad - K), (0, Cout_pad - Cout)))
    w_mat = w_mat.astype(CONV_COMPUTE_DTYPE)
    b_mat = jnp.pad(bias.reshape(1, Cout),
                    ((0, 0), (0, Cout_pad - Cout))).astype(jnp.float32)

    tile_m = _pick_tile_rows(M, max_rows=CONV_TILE_M, align=SUBLANE_BF16)
    num_tiles = pl.cdiv(M, tile_m)
    M_pad = num_tiles * tile_m
    if M_pad != M or K_pad != K:
        patches = jnp.pad(patches, ((0, M_pad - M), (0, K_pad - K)))

    out = pl.pallas_call(
        functools.partial(_conv_matmul_kernel, apply_relu=apply_relu),
        out_shape=jax.ShapeDtypeStruct((M_pad, Cout_pad), CONV_COMPUTE_DTYPE),
        grid=(num_tiles,),
        in_specs=[
            pl.BlockSpec((tile_m, K_pad), lambda i: (i, 0)),
            _resident_spec((K_pad, Cout_pad)),
            _resident_spec((1, Cout_pad)),
        ],
        out_specs=pl.BlockSpec((tile_m, Cout_pad), lambda i: (i, 0)),
        compiler_params=pltpu.CompilerParams(
            dimension_semantics=("parallel",)),
    )(patches, w_mat, b_mat)
    if M_pad != M:
        out = out[:M]
    return out.reshape(N, Ho, Wo, Cout_pad)   # channel axis kept lane-padded


def _nchw_view(h_nhwc_padded, real_c):
    """Drop lane padding and return a PyTorch-layout f32 NCHW tensor (used
    only at hook-capture / final-output boundaries)."""
    return jnp.transpose(h_nhwc_padded[..., :real_c],
                         (0, 3, 1, 2)).astype(jnp.float32)


# ----------------------------------------------------------------------------
# Bilinear upsample (nn.Upsample(mode='bilinear', align_corners=False))
# ----------------------------------------------------------------------------
def _bilinear_matrix_np(in_size, out_size):
    """1-D interp matrix matching nn.Upsample(mode='bilinear',
    align_corners=False)."""
    scale = in_size / out_size
    dst = np.arange(out_size)
    src = np.maximum((dst + 0.5) * scale - 0.5, 0.0)
    x0 = np.floor(src).astype(np.int64)
    x1 = np.minimum(x0 + 1, in_size - 1)
    frac = (src - x0).astype(np.float32)
    mat = np.zeros((out_size, in_size), dtype=np.float32)
    mat[dst, x0] += (1.0 - frac)
    mat[dst, x1] += frac
    return mat


@functools.lru_cache(maxsize=None)
def _bilinear_matrices(hi, wi, ho, wo):
    return _bilinear_matrix_np(hi, ho), _bilinear_matrix_np(wi, wo)


def bilinear_upsample_pallas(x_nchw, out_hw):
    """Separable bilinear upsample: per feature map, out = A @ X @ B^T, fused
    into one Pallas kernel (two batched MXU matmuls)."""
    N, C, Hi, Wi = x_nchw.shape
    Ho, Wo = int(out_hw[0]), int(out_hw[1])
    A_np, B_np = _bilinear_matrices(Hi, Wi, Ho, Wo)
    a = jnp.asarray(A_np, dtype=CONV_COMPUTE_DTYPE)      # [Ho, Hi]
    bt = jnp.asarray(B_np.T, dtype=CONV_COMPUTE_DTYPE)   # [Wi, Wo]

    NC = N * C
    x_flat = x_nchw.reshape(NC, Hi, Wi).astype(CONV_COMPUTE_DTYPE)
    tile_nc = _pick_tile_rows(NC, max_rows=UPSAMPLE_TILE_NC, align=8)
    num_tiles = pl.cdiv(NC, tile_nc)
    NC_pad = num_tiles * tile_nc
    if NC_pad != NC:
        x_flat = jnp.pad(x_flat, ((0, NC_pad - NC), (0, 0), (0, 0)))

    out = pl.pallas_call(
        _bilinear_sep_kernel,
        out_shape=jax.ShapeDtypeStruct((NC_pad, Ho, Wo), jnp.float32),
        grid=(num_tiles,),
        in_specs=[
            pl.BlockSpec((tile_nc, Hi, Wi), lambda i: (i, 0, 0)),
            _resident_spec((Wi, Wo)),
            _resident_spec((Ho, Hi)),
        ],
        out_specs=pl.BlockSpec((tile_nc, Ho, Wo), lambda i: (i, 0, 0)),
        compiler_params=pltpu.CompilerParams(
            dimension_semantics=("parallel",)),
    )(x_flat, bt, a)
    if NC_pad != NC:
        out = out[:NC]
    return out.reshape(N, C, Ho, Wo)


# ----------------------------------------------------------------------------
# Synthetic submodule (stands in for the PyTorch submodule being hooked)
# ----------------------------------------------------------------------------
class SmallConvNet:
    """conv1(3x3, pad1) + ReLU  ->  conv2(3x3, pad1, stride2).

    External interface is NCHW (PyTorch convention); internally activations
    are NHWC and 128-lane channel-padded end-to-end; slices back to the real
    channel count happen only at hook-capture / output boundaries."""

    LAYERS = ("conv1", "conv2")

    def __init__(self, params):
        self.params = params
        self._hooks = {}               # layername -> [hook_fn, ...]

    def eval(self):                    # parity with nn.Module.eval()
        return self

    def register_forward_hook(self, layername, fn):
        self._hooks.setdefault(layername, []).append(fn)
        return (layername, fn)

    def remove_hook(self, handle):
        layername, fn = handle
        self._hooks[layername].remove(fn)

    def _layer(self, name, h):
        if name == "conv1":
            return conv2d_nhwc_pallas(h, self.params["w1"], self.params["b1"],
                                      stride=1, padding=1, apply_relu=True)
        return conv2d_nhwc_pallas(h, self.params["w2"], self.params["b2"],
                                  stride=2, padding=1, apply_relu=False)

    def _out_channels(self, name):
        return int(self.params["w1" if name == "conv1" else "w2"].shape[0])

    def __call__(self, x_nchw):
        h = jnp.transpose(x_nchw, (0, 2, 3, 1)).astype(CONV_COMPUTE_DTYPE)
        real_c = x_nchw.shape[1]
        for name in self.LAYERS:
            hooks = self._hooks.get(name, ())
            inp_nchw = (_nchw_view(h, real_c),) if hooks else None
            h = self._layer(name, h)
            real_c = self._out_channels(name)
            if hooks:
                out_nchw = _nchw_view(h, real_c)
                for fn in hooks:       # forward-hook style: fn(module, inputs, output)
                    fn(name, inp_nchw, out_nchw)
        return _nchw_view(h, real_c)   # NHWC(padded) -> NCHW once


# ----------------------------------------------------------------------------
# HookBasedFeatureExtractor (forward-pass semantics of the PyTorch module)
# ----------------------------------------------------------------------------
class HookBasedFeatureExtractor:
    def __init__(self, submodule, layername, upscale=False):
        self.submodule = submodule
        self.submodule.eval()
        self.layername = layername
        self.outputs_size = None
        self.outputs = None
        self.inputs = None
        self.inputs_size = None
        self.upscale = upscale
        # whole forward (transposes, im2col, pallas_calls, upsample) under one
        # jit; hook captures come back as traced outputs, not side effects.
        self._jitted_forward = jax.jit(self._traced_forward)

    # --- PyTorch-hook-style capture methods (operate on concrete arrays) ----
    def get_input_array(self, m, i, o):
        if isinstance(i, (tuple, list)):
            self.inputs = [jnp.asarray(i[idx]) for idx in range(len(i))]
            self.inputs_size = [inp.shape for inp in self.inputs]
        else:
            self.inputs = jnp.asarray(i)
            self.inputs_size = self.inputs.shape

    def get_output_array(self, m, i, o):
        if isinstance(o, (tuple, list)):
            self.outputs = [jnp.asarray(o[idx]) for idx in range(len(o))]
            self.outputs_size = [out.shape for out in self.outputs]
        else:
            self.outputs = jnp.asarray(o)
            self.outputs_size = self.outputs.shape

    def rescale_output_array(self, newsize):
        out_hw = tuple(int(s) for s in newsize[2:])
        if isinstance(self.outputs, list):
            self.outputs = [bilinear_upsample_pallas(o, out_hw)
                            for o in self.outputs]
        else:
            self.outputs = bilinear_upsample_pallas(self.outputs, out_hw)

    # --- jitted pure forward -------------------------------------------------
    def _traced_forward(self, x):
        captured = {}

        def cap_in(m, i, o):
            captured["inputs"] = i

        def cap_out(m, i, o):
            captured["outputs"] = o

        h_inp = self.submodule.register_forward_hook(self.layername, cap_in)
        h_out = self.submodule.register_forward_hook(self.layername, cap_out)
        self.submodule(x)
        self.submodule.remove_hook(h_inp)
        self.submodule.remove_hook(h_out)

        raw_out = captured["outputs"]
        upsampled = None
        if self.upscale:
            out_hw = tuple(int(s) for s in x.shape[2:])
            if isinstance(raw_out, (tuple, list)):
                upsampled = [bilinear_upsample_pallas(o, out_hw)
                             for o in raw_out]
            else:
                upsampled = bilinear_upsample_pallas(raw_out, out_hw)
        return captured["inputs"], raw_out, upsampled

    def forward(self, x):
        inputs, raw_out, upsampled = self._jitted_forward(x)
        self.get_input_array(None, inputs, None)
        self.get_output_array(None, None, raw_out)     # sizes = pre-upscale
        if self.upscale:
            self.outputs = upsampled
        return (self.inputs, self.outputs)

    __call__ = forward


# ----------------------------------------------------------------------------
# Pure-JAX references for validation
# ----------------------------------------------------------------------------
def _ref_conv(x, w, b, stride, pad, relu):
    out = jax.lax.conv_general_dilated(
        x, w, (stride, stride), ((pad, pad), (pad, pad)),
        dimension_numbers=("NCHW", "OIHW", "NCHW"),
        precision=jax.lax.Precision.HIGHEST)
    out = out + b[None, :, None, None]
    return jnp.maximum(out, 0.0) if relu else out


def _ref_bilinear(x, out_hw):
    N, C, Hi, Wi = x.shape
    Ho, Wo = out_hw
    A = jnp.asarray(_bilinear_matrix_np(Hi, Ho))
    B = jnp.asarray(_bilinear_matrix_np(Wi, Wo))
    return jnp.einsum("oh,nchw,qw->ncoq", A, x, B,
                      precision=jax.lax.Precision.HIGHEST)


if __name__ == "__main__":
    key = jax.random.PRNGKey(0)
    kx, k1, kb1, k2, kb2 = jax.random.split(key, 5)

    N, Cin, H, W = 2, 4, 16, 16
    C1, C2 = 8, 8
    x = jax.random.normal(kx, (N, Cin, H, W), jnp.float32)
    params = {
        "w1": jax.random.normal(k1, (C1, Cin, 3, 3), jnp.float32) * 0.1,
        "b1": jax.random.normal(kb1, (C1,), jnp.float32) * 0.1,
        "w2": jax.random.normal(k2, (C2, C1, 3, 3), jnp.float32) * 0.1,
        "b2": jax.random.normal(kb2, (C2,), jnp.float32) * 0.1,
    }

    net = SmallConvNet(params)
    extractor = HookBasedFeatureExtractor(net, "conv2", upscale=True)
    inputs, outputs = extractor.forward(x)
    jax.block_until_ready(inputs)
    jax.block_until_ready(outputs)

    # --- validation against pure-JAX references ---
    h1_ref = _ref_conv(x, params["w1"], params["b1"], 1, 1, True)
    h2_ref = _ref_conv(h1_ref, params["w2"], params["b2"], 2, 1, False)
    out_ref = _ref_bilinear(h2_ref, (H, W))
    # independent (non-circular) cross-check of the interpolation itself:
    out_ref_img = jax.image.resize(h2_ref, (N, C2, H, W), method="bilinear")

    assert isinstance(inputs, list) and len(inputs) == 1
    assert inputs[0].shape == (N, C1, H, W)
    assert outputs.shape == (N, C2, H, W)
    # bf16 conv inputs/weights/outputs with f32 accumulation -> loosened
    # tolerance vs the f32 reference.
    np.testing.assert_allclose(np.asarray(inputs[0], np.float32),
                               np.asarray(h1_ref), rtol=3e-2, atol=3e-2)
    np.testing.assert_allclose(np.asarray(outputs, np.float32),
                               np.asarray(out_ref), rtol=3e-2, atol=3e-2)
    np.testing.assert_allclose(np.asarray(outputs, np.float32),
                               np.asarray(out_ref_img), rtol=3e-2, atol=3e-2)

    print("KERNEL_OK")
</pallas_src>

<mosaic_0001>
module attributes {stable_mosaic.version = 11 : i64} {
  func.func @_conv_matmul_kernel(%arg0: i32, %arg1: memref<256x128xbf16, #tpu.memory_space<vmem>>, %arg2: memref<128x128xbf16, #tpu.memory_space<vmem>>, %arg3: memref<1x128xf32, #tpu.memory_space<vmem>>, %arg4: memref<256x128xbf16, #tpu.memory_space<vmem>>) attributes {dimension_semantics = [#tpu.dimension_semantics<parallel>], iteration_bounds = array<i64: 2>, scalar_prefetch = 0 : i64, scratch_operands = 0 : i64, tpu.core_type = #tpu.core_type<tc>, window_params = [{transform_indices = @transform_0, window_bounds = array<i64: 256, 128>}, {pipeline_mode = #tpu.pipeline_mode<synchronous>, transform_indices = @transform_1, window_bounds = array<i64: 128, 128>}, {pipeline_mode = #tpu.pipeline_mode<synchronous>, transform_indices = @transform_2, window_bounds = array<i64: 1, 128>}, {transform_indices = @transform_3, window_bounds = array<i64: 256, 128>}]} {
    %c0 = arith.constant 0 : index
    %c0_0 = arith.constant 0 : index
    %0 = vector.load %arg1[%c0, %c0_0] : memref<256x128xbf16, #tpu.memory_space<vmem>>, vector<256x128xbf16>
    %c0_1 = arith.constant 0 : index
    %c0_2 = arith.constant 0 : index
    %1 = vector.load %arg2[%c0_1, %c0_2] : memref<128x128xbf16, #tpu.memory_space<vmem>>, vector<128x128xbf16>
    %cst = arith.constant dense<0.000000e+00> : vector<256x128xf32>
    %2 = tpu.matmul %0, %1, %cst {dimension_numbers = #tpu.dot_dimension_numbers<[1], [0], [0], [1], [0, 0, 1, 1], [], []>} : vector<256x128xbf16>, vector<128x128xbf16>, vector<256x128xf32> -> vector<256x128xf32>
    %c0_3 = arith.constant 0 : index
    %c0_4 = arith.constant 0 : index
    %3 = vector.load %arg3[%c0_3, %c0_4] : memref<1x128xf32, #tpu.memory_space<vmem>>, vector<1x128xf32>
    %4 = vector.broadcast %3 : vector<1x128xf32> to vector<256x128xf32>
    %5 = arith.addf %2, %4 : vector<256x128xf32>
    %cst_5 = arith.constant 0.000000e+00 : f32
    %6 = vector.broadcast %cst_5 : f32 to vector<256x128xf32>
    %7 = arith.maximumf %5, %6 : vector<256x128xf32>
    %8 = arith.truncf %7 : vector<256x128xf32> to vector<256x128xbf16>
    %c0_6 = arith.constant 0 : index
    %c0_7 = arith.constant 0 : index
    %9 = vector.load %arg4[%c0_6, %c0_7] : memref<256x128xbf16, #tpu.memory_space<vmem>>, vector<256x128xbf16>
    tpu.vector_store %arg4[%c0_6, %c0_7], %8 {strides = array<i32>} : memref<256x128xbf16, #tpu.memory_space<vmem>>, vector<256x128xbf16>,
    return
  }
  func.func @transform_0(%arg0: i32) -> (i32, i32) {
    %c0_i32 = arith.constant 0 : i32
    %c0_i32_0 = arith.constant 0 : i32
    return %arg0, %c0_i32 : i32, i32
  }
  func.func @transform_1(%arg0: i32) -> (i32, i32) {
    %c0_i32 = arith.constant 0 : i32
    %c0_i32_0 = arith.constant 0 : i32
    %c0_i32_1 = arith.constant 0 : i32
    return %c0_i32, %c0_i32_0 : i32, i32
  }
  func.func @transform_2(%arg0: i32) -> (i32, i32) {
    %c0_i32 = arith.constant 0 : i32
    %c0_i32_0 = arith.constant 0 : i32
    %c0_i32_1 = arith.constant 0 : i32
    return %c0_i32, %c0_i32_0 : i32, i32
  }
  func.func @transform_3(%arg0: i32) -> (i32, i32) {
    %c0_i32 = arith.constant 0 : i32
    %c0_i32_0 = arith.constant 0 : i32
    return %arg0, %c0_i32 : i32, i32
  }
}

module attributes {stable_mosaic.version = 11 : i64} {
  func.func @_conv_matmul_kernel(%arg0: i32, %arg1: memref<64x1152xbf16, #tpu.memory_space<vmem>>, %arg2: memref<1152x128xbf16, #tpu.memory_space<vmem>>, %arg3: memref<1x128xf32, #tpu.memory_space<vmem>>, %arg4: memref<64x128xbf16, #tpu.memory_space<vmem>>) attributes {dimension_semantics = [#tpu.dimension_semantics<parallel>], iteration_bounds = array<i64: 2>, scalar_prefetch = 0 : i64, scratch_operands = 0 : i64, tpu.core_type = #tpu.core_type<tc>, window_params = [{transform_indices = @transform_0, window_bounds = array<i64: 64, 1152>}, {pipeline_mode = #tpu.pipeline_mode<synchronous>, transform_indices = @transform_1, window_bounds = array<i64: 1152, 128>}, {pipeline_mode = #tpu.pipeline_mode<synchronous>, transform_indices = @transform_2, window_bounds = array<i64: 1, 128>}, {transform_indices = @transform_3, window_bounds = array<i64: 64, 128>}]} {
    %c0 = arith.constant 0 : index
    %c0_0 = arith.constant 0 : index
    %0 = vector.load %arg1[%c0, %c0_0] : memref<64x1152xbf16, #tpu.memory_space<vmem>>, vector<64x1152xbf16>
    %c0_1 = arith.constant 0 : index
    %c0_2 = arith.constant 0 : index
    %1 = vector.load %arg2[%c0_1, %c0_2] : memref<1152x128xbf16, #tpu.memory_space<vmem>>, vector<1152x128xbf16>
    %cst = arith.constant dense<0.000000e+00> : vector<64x128xf32>
    %2 = tpu.matmul %0, %1, %cst {dimension_numbers = #tpu.dot_dimension_numbers<[1], [0], [0], [1], [0, 0, 1, 1], [], []>} : vector<64x1152xbf16>, vector<1152x128xbf16>, vector<64x128xf32> -> vector<64x128xf32>
    %c0_3 = arith.constant 0 : index
    %c0_4 = arith.constant 0 : index
    %3 = vector.load %arg3[%c0_3, %c0_4] : memref<1x128xf32, #tpu.memory_space<vmem>>, vector<1x128xf32>
    %4 = vector.broadcast %3 : vector<1x128xf32> to vector<64x128xf32>
    %5 = arith.addf %2, %4 : vector<64x128xf32>
    %6 = arith.truncf %5 : vector<64x128xf32> to vector<64x128xbf16>
    %c0_5 = arith.constant 0 : index
    %c0_6 = arith.constant 0 : index
    %7 = vector.load %arg4[%c0_5, %c0_6] : memref<64x128xbf16, #tpu.memory_space<vmem>>, vector<64x128xbf16>
    tpu.vector_store %arg4[%c0_5, %c0_6], %6 {strides = array<i32>} : memref<64x128xbf16, #tpu.memory_space<vmem>>, vector<64x128xbf16>,
    return
  }
  func.func @transform_0(%arg0: i32) -> (i32, i32) {
    %c0_i32 = arith.constant 0 : i32
    %c0_i32_0 = arith.constant 0 : i32
    return %arg0, %c0_i32 : i32, i32
  }
  func.func @transform_1(%arg0: i32) -> (i32, i32) {
    %c0_i32 = arith.constant 0 : i32
    %c0_i32_0 = arith.constant 0 : i32
    %c0_i32_1 = arith.constant 0 : i32
    return %c0_i32, %c0_i32_0 : i32, i32
  }
  func.func @transform_2(%arg0: i32) -> (i32, i32) {
    %c0_i32 = arith.constant 0 : i32
    %c0_i32_0 = arith.constant 0 : i32
    %c0_i32_1 = arith.constant 0 : i32
    return %c0_i32, %c0_i32_0 : i32, i32
  }
  func.func @transform_3(%arg0: i32) -> (i32, i32) {
    %c0_i32 = arith.constant 0 : i32
    %c0_i32_0 = arith.constant 0 : i32
    return %arg0, %c0_i32 : i32, i32
  }
}

module attributes {stable_mosaic.version = 11 : i64} {
  func.func @_bilinear_sep_kernel(%arg0: i32, %arg1: memref<8x8x8xbf16, #tpu.memory_space<vmem>>, %arg2: memref<8x16xbf16, #tpu.memory_space<vmem>>, %arg3: memref<16x8xbf16, #tpu.memory_space<vmem>>, %arg4: memref<8x16x16xf32, #tpu.memory_space<vmem>>) attributes {dimension_semantics = [#tpu.dimension_semantics<parallel>], iteration_bounds = array<i64: 2>, scalar_prefetch = 0 : i64, scratch_operands = 0 : i64, tpu.core_type = #tpu.core_type<tc>, window_params = [{transform_indices = @transform_0, window_bounds = array<i64: 8, 8, 8>}, {pipeline_mode = #tpu.pipeline_mode<synchronous>, transform_indices = @transform_1, window_bounds = array<i64: 8, 16>}, {pipeline_mode = #tpu.pipeline_mode<synchronous>, transform_indices = @transform_2, window_bounds = array<i64: 16, 8>}, {transform_indices = @transform_3, window_bounds = array<i64: 8, 16, 16>}]} {
    %c0 = arith.constant 0 : index
    %c0_0 = arith.constant 0 : index
    %c0_1 = arith.constant 0 : index
    %0 = vector.load %arg1[%c0, %c0_0, %c0_1] : memref<8x8x8xbf16, #tpu.memory_space<vmem>>, vector<8x8x8xbf16>
    %c0_2 = arith.constant 0 : index
    %c0_3 = arith.constant 0 : index
    %1 = vector.load %arg2[%c0_2, %c0_3] : memref<8x16xbf16, #tpu.memory_space<vmem>>, vector<8x16xbf16>
    %2 = vector.shape_cast %1 : vector<8x16xbf16> to vector<1x8x16xbf16>
    %3 = vector.shape_cast %2 : vector<1x8x16xbf16> to vector<1x8x16xbf16>
    %4 = vector.broadcast %3 : vector<1x8x16xbf16> to vector<8x8x16xbf16>
    "tpu.trace_start"() <{level = 10 : i32, message = "bhw,bwq->bhq"}> : () -> ()
    %cst = arith.constant dense<0.000000e+00> : vector<8x8x16xf32>
    %5 = tpu.matmul %0, %4, %cst {dimension_numbers = #tpu.dot_dimension_numbers<[2], [1], [1], [2], [0, 0, 0, 1, 1, 2], [0], [0]>} : vector<8x8x8xbf16>, vector<8x8x16xbf16>, vector<8x8x16xf32> -> vector<8x8x16xf32>
    "tpu.trace_stop"() : () -> ()
    %c0_4 = arith.constant 0 : index
    %c0_5 = arith.constant 0 : index
    %6 = vector.load %arg3[%c0_4, %c0_5] : memref<16x8xbf16, #tpu.memory_space<vmem>>, vector<16x8xbf16>
    %7 = vector.shape_cast %6 : vector<16x8xbf16> to vector<1x16x8xbf16>
    %8 = vector.shape_cast %7 : vector<1x16x8xbf16> to vector<1x16x8xbf16>
    %9 = vector.broadcast %8 : vector<1x16x8xbf16> to vector<8x16x8xbf16>
    %10 = arith.truncf %5 : vector<8x8x16xf32> to vector<8x8x16xbf16>
    "tpu.trace_start"() <{level = 10 : i32, message = "boh,bhq->boq"}> : () -> ()
    %cst_6 = arith.constant dense<0.000000e+00> : vector<8x16x16xf32>
    %11 = tpu.matmul %9, %10, %cst_6 {dimension_numbers = #tpu.dot_dimension_numbers<[2], [1], [1], [2], [0, 0, 0, 1, 1, 2], [0], [0]>} : vector<8x16x8xbf16>, vector<8x8x16xbf16>, vector<8x16x16xf32> -> vector<8x16x16xf32>
    "tpu.trace_stop"() : () -> ()
    %c0_7 = arith.constant 0 : index
    %c0_8 = arith.constant 0 : index
    %c0_9 = arith.constant 0 : index
    %12 = vector.load %arg4[%c0_7, %c0_8, %c0_9] : memref<8x16x16xf32, #tpu.memory_space<vmem>>, vector<8x16x16xf32>
    tpu.vector_store %arg4[%c0_7, %c0_8, %c0_9], %11 {strides = array<i32>} : memref<8x16x16xf32, #tpu.memory_space<vmem>>, vector<8x16x16xf32>,
    return
  }
  func.func @transform_0(%arg0: i32) -> (i32, i32, i32) {
    %c0_i32 = arith.constant 0 : i32
    %c0_i32_0 = arith.constant 0 : i32
    %c0_i32_1 = arith.constant 0 : i32
    return %arg0, %c0_i32, %c0_i32_0 : i32, i32, i32
  }
  func.func @transform_1(%arg0: i32) -> (i32, i32) {
    %c0_i32 = arith.constant 0 : i32
    %c0_i32_0 = arith.constant 0 : i32
    %c0_i32_1 = arith.constant 0 : i32
    return %c0_i32, %c0_i32_0 : i32, i32
  }
  func.func @transform_2(%arg0: i32) -> (i32, i32) {
    %c0_i32 = arith.constant 0 : i32
    %c0_i32_0 = arith.constant 0 : i32
    %c0_i32_1 = arith.constant 0 : i32
    return %c0_i32, %c0_i32_0 : i32, i32
  }
  func.func @transform_3(%arg0: i32) -> (i32, i32, i32) {
    %c0_i32 = arith.constant 0 : i32
    %c0_i32_0 = arith.constant 0 : i32
    %c0_i32_1 = arith.constant 0 : i32
    return %arg0, %c0_i32, %c0_i32_0 : i32, i32, i32
  }
}

</mosaic_0001>

<llo_original>
// kernel: _traced_forward.3
$region0: #{_traced_forward.3}
  #allocation0 [shape = 'u32[]', space=smem, size = 0x4, offset = 0x4, fixed_abs, tag = 'smem constant byte address 0x4 - core index']
  #allocation1 [shape = 'u32[72,128]{1,0:T(1,128)}', space=vmem, size = 0x9000, scoped, tag = 'internal scratch']
  %s0 = inlined_call_operand.vmem [shape: bf16[512,128], index: 0, kind: input, shape index: {}]
  %s1 = inlined_call_operand.vmem [shape: bf16[128,128], index: 1, kind: input, shape index: {}]
  %s2 = inlined_call_operand.vmem [shape: f32[1,128], index: 2, kind: input, shape index: {}]
  %s3 = inlined_call_operand.vmem [shape: bf16[512,128], index: 3, kind: output, shape index: {}]
  %s4 = sld [smem:[#allocation0]]
  $region45: #{_traced_forward.3} parent=0
    _
  %s6 = ssub.s32 1, %s4
  %s7 = scalar_select 0, %s6, %s4
  loop: start=0, step=1, limit=4
  $region2: #{_traced_forward.3} parent=0 // loop_pre_header
    _
  $region3: #{_traced_forward.3} parent=0 // loop_header
    %s9 = sphi 0, %s13
    %p10 = scmp.ge.s32.totalorder %s9, 4
    %s19 = sphi 0, %s21
    %s22 = sphi 0, %s19
    %s23 = sphi 0, %s22
    %s39 = sphi 0, %s23
    %s43 = sphi 0, %s43
    %s45 = sphi 0, %s43
    %s46 = sphi 0, %s45
    %s60 = sphi 0, %s46
    %s64 = sphi 0, %s64
    %s66 = sphi 0, %s64
    %s67 = sphi 0, %s66
    %s81 = sphi 0, %s67
    %s87 = sphi 0, %s89
    %s90 = sphi 0, %s87
    %s91 = sphi 0, %s90
    %s107 = sphi 0, %s91
  $region4: #{_traced_forward.3} parent=0 // loop_header_branch
    %12 = sbr.rel (%p10) target = $region8
  $region5: #{_traced_forward.3} parent=0 // loop_body
    %s14 = ssub.s32 %s9, 1
    %s15 = ssub.s32 %s9, 2
    %s16 = sadd.s32 %s9, 1
    %s17 = ssub.s32 %s9, %s16
    %p18 = scmp.eq.s32.totalorder %s17, 0
    %s20 = sadd.s32 %s19, 1
    %s21 = scalar_select %p18, %s19, %s20
    %p24 = pneg %p18
    %p25 = scmp.eq.s32.totalorder %s9, 1
    %p26 = por %p24, %p25
    %p27 = scmp.ne.s32.totalorder %s19, %s22
    %p28 = scmp.eq.s32.totalorder %s9, 0
    %p29 = por %p27, %p28
    %p30 = scmp.ne.s32.totalorder %s19, %s22
    %p31 = scmp.eq.s32.totalorder %s14, 1
    %p32 = por %p30, %p31
    %p33 = scmp.ne.s32.totalorder %s22, %s23
    %p34 = scmp.eq.s32.totalorder %s14, 0
    %p35 = por %p33, %p34
    %p36 = scmp.ne.s32.totalorder %s22, %s23
    %p37 = scmp.eq.s32.totalorder %s15, 1
    %p38 = por %p36, %p37
    %p40 = scmp.ne.s32.totalorder %s23, %s39
    %p41 = scmp.eq.s32.totalorder %s15, 0
    %p42 = por %p40, %p41
    %s44 = sadd.s32 %s43, 1
    %p47 = scmp.eq.s32.totalorder %s9, 1
    %p48 = scmp.ne.s32.totalorder %s43, %s45
    %p49 = scmp.eq.s32.totalorder %s9, 0
    %p50 = por %p48, %p49
    %p51 = scmp.ne.s32.totalorder %s43, %s45
    %p52 = scmp.eq.s32.totalorder %s14, 1
    %p53 = por %p51, %p52
    %p54 = scmp.ne.s32.totalorder %s45, %s46
    %p55 = scmp.eq.s32.totalorder %s14, 0
    %p56 = por %p54, %p55
    %p57 = scmp.ne.s32.totalorder %s45, %s46
    %p58 = scmp.eq.s32.totalorder %s15, 1
    %p59 = por %p57, %p58
    %p61 = scmp.ne.s32.totalorder %s46, %s60
    %p62 = scmp.eq.s32.totalorder %s15, 0
    %p63 = por %p61, %p62
    %s65 = sadd.s32 %s64, 1
    %p68 = scmp.eq.s32.totalorder %s9, 1
    %p69 = scmp.ne.s32.totalorder %s64, %s66
    %p70 = scmp.eq.s32.totalorder %s9, 0
    %p71 = por %p69, %p70
    %p72 = scmp.ne.s32.totalorder %s64, %s66
    %p73 = scmp.eq.s32.totalorder %s14, 1
    %p74 = por %p72, %p73
    %p75 = scmp.ne.s32.totalorder %s66, %s67
    %p76 = scmp.eq.s32.totalorder %s14, 0
    %p77 = por %p75, %p76
    %p78 = scmp.ne.s32.totalorder %s66, %s67
    %p79 = scmp.eq.s32.totalorder %s15, 1
    %p80 = por %p78, %p79
    %p82 = scmp.ne.s32.totalorder %s67, %s81
    %p83 = scmp.eq.s32.totalorder %s15, 0
    %p84 = por %p82, %p83
    %s85 = ssub.s32 %s9, %s16
    %p86 = scmp.eq.s32.totalorder %s85, 0
    %s88 = sadd.s32 %s87, 1
    %s89 = scalar_select %p86, %s87, %s88
    %p92 = pneg %p86
    %p93 = scmp.eq.s32.totalorder %s9, 1
    %p94 = por %p92, %p93
    %p95 = scmp.ne.s32.totalorder %s87, %s90
    %p96 = scmp.eq.s32.totalorder %s9, 0
    %p97 = por %p95, %p96
    %p98 = scmp.ne.s32.totalorder %s87, %s90
    %p99 = scmp.eq.s32.totalorder %s14, 1
    %p100 = por %p98, %p99
    %p101 = scmp.ne.s32.totalorder %s90, %s91
    %p102 = scmp.eq.s32.totalorder %s14, 0
    %p103 = por %p101, %p102
    %p104 = scmp.ne.s32.totalorder %s90, %s91
    %p105 = scmp.eq.s32.totalorder %s15, 1
    %p106 = por %p104, %p105
    %p108 = scmp.ne.s32.totalorder %s91, %s107
    %p109 = scmp.eq.s32.totalorder %s15, 0
    %p110 = por %p108, %p109
    %p111 = scmp.le.s32.totalorder 1, %s9
    %p112 = scmp.lt.s32.totalorder %s9, 3
    %p113 = pnand %p111, %p112
    %p114 = pneg %p113
    // Predicated region
    $region9: #{_traced_forward.3} parent=5 // pred_check
      _
    $region10: #{_traced_forward.3} parent=5 // pred_check_branch
      %116 = sbr.rel (%p113) target = $region12
    $region11: #{_traced_forward.3} parent=5 // pred_region
      %s117 = ssub.s32 %s9, 1
      // Predicated region
      $region13: #{_traced_forward.3} parent=11 // pred_check
        %p118 = pneg %p56
      $region14: #{_traced_forward.3} parent=11 // pred_check_branch
        %120 = sbr.rel (%p118) target = $region16
      $region15: #{_traced_forward.3} parent=11 // pred_region
        _
      $region16: #{_traced_forward.3} parent=11 // pred_fallthru
        _
      // Predicated region
      $region17: #{_traced_forward.3} parent=11 // pred_check
        %p121 = pneg %p77
      $region18: #{_traced_forward.3} parent=11 // pred_check_branch
        %123 = sbr.rel (%p121) target = $region20
      $region19: #{_traced_forward.3} parent=11 // pred_region
        _
      $region20: #{_traced_forward.3} parent=11 // pred_fallthru
        _
    $region12: #{_traced_forward.3} parent=5 // pred_fallthru
      _
    %p124 = scmp.lt.s32.totalorder %s9, 2
    // Predicated region
    $region21: #{_traced_forward.3} parent=5 // pred_check
      %p125 = pneg %p124
    $region22: #{_traced_forward.3} parent=5 // pred_check_branch
      %127 = sbr.rel (%p125) target = $region24
    $region23: #{_traced_forward.3} parent=5 // pred_region
      // Predicated region
      $region25: #{_traced_forward.3} parent=23 // pred_check
        %p128 = pneg %p29
      $region26: #{_traced_forward.3} parent=23 // pred_check_branch
        %130 = sbr.rel (%p128) target = $region28
      $region27: #{_traced_forward.3} parent=23 // pred_region
        %s131 = smul.u32 32, %s9
        %p132 = scmp.lt.s32.totalorder %s131, 63
        %s133 = scalar_select %p132, %s131, 63
        %s134 = smul.addr %s133, 4
        %s135 = scalar_lea.vmem %s0, %s134
        %s136 = smul.u32 32, %s9
      $region28: #{_traced_forward.3} parent=23 // pred_fallthru
        _
    $region24: #{_traced_forward.3} parent=5 // pred_fallthru
      _
    %p137 = scmp.le.s32.totalorder 1, %s9
    %p138 = scmp.lt.s32.totalorder %s9, 3
    %p139 = pnand %p137, %p138
    %p140 = pneg %p139
    // Predicated region
    $region29: #{_traced_forward.3} parent=5 // pred_check
      _
    $region30: #{_traced_forward.3} parent=5 // pred_check_branch
      %142 = sbr.rel (%p139) target = $region32
    $region31: #{_traced_forward.3} parent=5 // pred_region
      %s143 = ssub.s32 %s9, 1
      %s144 = smul.u32 32, %s14
      %p145 = scmp.lt.s32.totalorder %s144, 63
      %s146 = scalar_select %p145, %s144, 63
      %s147 = smul.addr %s146, 4
      %s148 = scalar_lea.vmem %s0, %s147
      %p149 = pneg %p35
      %p150 = pneg %p32
      %p151 = pneg %p56
      %p152 = pneg %p53
      %p153 = pneg %p77
      %p154 = pneg %p74
      %p155 = pneg %p103
      %p156 = pneg %p100
      %s157 = smul.u32 32, %s14
      %p158 = scmp.lt.s32.totalorder %s157, 63
      %s159 = scalar_select %p158, %s157, 63
      %s160 = smul.addr %s159, 4
      %s161 = scalar_lea.vmem %s3, %s160
      %s162 = smul.u32 32, %s14
      %p163 = scmp.lt.s32.totalorder %s162, 63
      %s164 = scalar_select %p163, %s162, 63
      %s165 = smul.addr %s164, 4
      %s166 = scalar_lea.vmem %s0, %s165
      %s167 = smul.u32 32, %s14
      %s168 = smul.u32 32, %s14
      %p169 = scmp.lt.s32.totalorder %s168, 63
      %s170 = scalar_select %p169, %s168, 63
      %s171 = smul.addr %s170, 4
      %s172 = scalar_lea.vmem %s3, %s171
      %s173 = smul.u32 32, %s14
      %v174 = vld [vmem:[%s166] sm:$0xf]
      %v175 = vld [vmem:[%s166 + $0x4] sm:$0xf]
      %v176 = vld [vmem:[%s166 + $0x8] sm:$0xf]
      %v177 = vld [vmem:[%s166 + $0xc] sm:$0xf]
      %v178 = vld [vmem:[%s166 + $0x10] sm:$0xf]
      %v179 = vld [vmem:[%s166 + $0x14] sm:$0xf]
      %v180 = vld [vmem:[%s166 + $0x18] sm:$0xf]
      %v181 = vld [vmem:[%s166 + $0x1c] sm:$0xf]
      %v182 = vld [vmem:[%s166 + $0x20] sm:$0xf]
      %v183 = vld [vmem:[%s166 + $0x24] sm:$0xf]
      %v184 = vld [vmem:[%s166 + $0x28] sm:$0xf]
      %v185 = vld [vmem:[%s166 + $0x2c] sm:$0xf]
      %v186 = vld [vmem:[%s166 + $0x30] sm:$0xf]
      %v187 = vld [vmem:[%s166 + $0x34] sm:$0xf]
      %v188 = vld [vmem:[%s166 + $0x38] sm:$0xf]
      %v189 = vld [vmem:[%s166 + $0x3c] sm:$0xf]
      %v190 = vld [vmem:[%s166 + $0x40] sm:$0xf]
      %v191 = vld [vmem:[%s166 + $0x44] sm:$0xf]
      %v192 = vld [vmem:[%s166 + $0x48] sm:$0xf]
      %v193 = vld [vmem:[%s166 + $0x4c] sm:$0xf]
      %v194 = vld [vmem:[%s166 + $0x50] sm:$0xf]
      %v195 = vld [vmem:[%s166 + $0x54] sm:$0xf]
      %v196 = vld [vmem:[%s166 + $0x58] sm:$0xf]
      %v197 = vld [vmem:[%s166 + $0x5c] sm:$0xf]
      %v198 = vld [vmem:[%s166 + $0x60] sm:$0xf]
      %v199 = vld [vmem:[%s166 + $0x64] sm:$0xf]
      %v200 = vld [vmem:[%s166 + $0x68] sm:$0xf]
      %v201 = vld [vmem:[%s166 + $0x6c] sm:$0xf]
      %v202 = vld [vmem:[%s166 + $0x70] sm:$0xf]
      %v203 = vld [vmem:[%s166 + $0x74] sm:$0xf]
      %v204 = vld [vmem:[%s166 + $0x78] sm:$0xf]
      %v205 = vld [vmem:[%s166 + $0x7c] sm:$0xf]
      %v206 = vld [vmem:[%s1] sm:$0xf]
      %v207 = vld [vmem:[%s1 + $0x4] sm:$0xf]
      %v208 = vld [vmem:[%s1 + $0x8] sm:$0xf]
      %v209 = vld [vmem:[%s1 + $0xc] sm:$0xf]
      %v210 = vld [vmem:[%s1 + $0x10] sm:$0xf]
      %v211 = vld [vmem:[%s1 + $0x14] sm:$0xf]
      %v212 = vld [vmem:[%s1 + $0x18] sm:$0xf]
      %v213 = vld [vmem:[%s1 + $0x1c] sm:$0xf]
      %v214 = vld [vmem:[%s1 + $0x20] sm:$0xf]
      %v215 = vld [vmem:[%s1 + $0x24] sm:$0xf]
      %v216 = vld [vmem:[%s1 + $0x28] sm:$0xf]
      %v217 = vld [vmem:[%s1 + $0x2c] sm:$0xf]
      %v218 = vld [vmem:[%s1 + $0x30] sm:$0xf]
      %v219 = vld [vmem:[%s1 + $0x34] sm:$0xf]
      %v220 = vld [vmem:[%s1 + $0x38] sm:$0xf]
      %v221 = vld [vmem:[%s1 + $0x3c] sm:$0xf]
      %v222 = vld [vmem:[%s2] sm:$0x1]
      %v224 = vperm.slane %v222, 0
      %v258 = vunpack.c.l.b16 %v174
      %v259 = vunpack.c.l.b16 %v175
      %v260 = vunpack.c.l.b16 %v176
      %v261 = vunpack.c.l.b16 %v177
      %v262 = vunpack.c.l.b16 %v178
      %v263 = vunpack.c.l.b16 %v179
      %v264 = vunpack.c.l.b16 %v180
      %v265 = vunpack.c.l.b16 %v181
      %v266 = vunpack.c.l.b16 %v182
      %v267 = vunpack.c.l.b16 %v183
      %v268 = vunpack.c.l.b16 %v184
      %v269 = vunpack.c.l.b16 %v185
      %v270 = vunpack.c.l.b16 %v186
      %v271 = vunpack.c.l.b16 %v187
      %v272 = vunpack.c.l.b16 %v188
      %v273 = vunpack.c.l.b16 %v189
      %v274 = vunpack.c.l.b16 %v190
      %v275 = vunpack.c.l.b16 %v191
      %v276 = vunpack.c.l.b16 %v192
      %v277 = vunpack.c.l.b16 %v193
      %v278 = vunpack.c.l.b16 %v194
      %v279 = vunpack.c.l.b16 %v195
      %v280 = vunpack.c.l.b16 %v196
      %v281 = vunpack.c.l.b16 %v197
      %v282 = vunpack.c.l.b16 %v198
      %v283 = vunpack.c.l.b16 %v199
      %v284 = vunpack.c.l.b16 %v200
      %v285 = vunpack.c.l.b16 %v201
      %v286 = vunpack.c.l.b16 %v202
      %v287 = vunpack.c.l.b16 %v203
      %v288 = vunpack.c.l.b16 %v204
      %v289 = vunpack.c.l.b16 %v205
      %v290 = vpack.c.b16 %v259, %v258
      %v291 = vpack.c.b16 %v261, %v260
      %v292 = vpack.c.b16 %v263, %v262
      %v293 = vpack.c.b16 %v265, %v264
      %v294 = vpack.c.b16 %v267, %v266
      %v295 = vpack.c.b16 %v269, %v268
      %v296 = vpack.c.b16 %v271, %v270
      %v297 = vpack.c.b16 %v273, %v272
      %v298 = vpack.c.b16 %v275, %v274
      %v299 = vpack.c.b16 %v277, %v276
      %v300 = vpack.c.b16 %v279, %v278
      %v301 = vpack.c.b16 %v281, %v280
      %v302 = vpack.c.b16 %v283, %v282
      %v303 = vpack.c.b16 %v285, %v284
      %v304 = vpack.c.b16 %v287, %v286
      %v305 = vpack.c.b16 %v289, %v288
      %v338 = vunpack.c.l.b16 %v206
      %v339 = vunpack.c.l.b16 %v207
      %v340 = vunpack.c.l.b16 %v208
      %v341 = vunpack.c.l.b16 %v209
      %v342 = vunpack.c.l.b16 %v210
      %v343 = vunpack.c.l.b16 %v211
      %v344 = vunpack.c.l.b16 %v212
      %v345 = vunpack.c.l.b16 %v213
      %v346 = vunpack.c.l.b16 %v214
      %v347 = vunpack.c.l.b16 %v215
      %v348 = vunpack.c.l.b16 %v216
      %v349 = vunpack.c.l.b16 %v217
      %v350 = vunpack.c.l.b16 %v218
      %v351 = vunpack.c.l.b16 %v219
      %v352 = vunpack.c.l.b16 %v220
      %v353 = vunpack.c.l.b16 %v221
      %v354 = vpack.c.b16 %v339, %v338
      %v355 = vpack.c.b16 %v341, %v340
      %v356 = vpack.c.b16 %v343, %v342
      %v357 = vpack.c.b16 %v345, %v344
      %v358 = vpack.c.b16 %v347, %v346
      %v359 = vpack.c.b16 %v349, %v348
      %v360 = vpack.c.b16 %v351, %v350
      %v361 = vpack.c.b16 %v353, %v352
      %370 = vmatpush.bf16.msra.mxu0 %v361
      %371 = vmatpush.bf16.msra.mxu0 %v360
      %372 = vmatpush.bf16.msra.mxu0 %v359
      %373 = vmatpush.bf16.msra.mxu0 %v358
      %374 = vmatpush.bf16.msra.mxu0 %v357
      %375 = vmatpush.bf16.msra.mxu0 %v356
      %376 = vmatpush.bf16.msra.mxu0 %v355
      %377 = vmatpush.bf16.msra.mxu0 %v354
      %378 = vmatmul.bf16.gmra.mxu0 %v290
      %v379 = vpop.f32.mrf.mxu0
      %v380 = vadd.f32 %v224, %v379
      %v381 = vpop.f32.mrf.mxu0
      %v382 = vadd.f32 %v224, %v381
      %383 = vmatmul.bf16.gmra.mxu0 %v291
      %v384 = vpop.f32.mrf.mxu0
      %v385 = vadd.f32 %v224, %v384
      %v386 = vpop.f32.mrf.mxu0
      %v387 = vadd.f32 %v224, %v386
      %388 = vmatmul.bf16.gmra.mxu0 %v292
      %v389 = vpop.f32.mrf.mxu0
      %v390 = vadd.f32 %v224, %v389
      %v391 = vpop.f32.mrf.mxu0
      %v392 = vadd.f32 %v224, %v391
      %393 = vmatmul.bf16.gmra.mxu0 %v293
      %v394 = vpop.f32.mrf.mxu0
      %v395 = vadd.f32 %v224, %v394
      %v396 = vpop.f32.mrf.mxu0
      %v397 = vadd.f32 %v224, %v396
      %398 = vmatmul.bf16.gmra.mxu0 %v294
      %v399 = vpop.f32.mrf.mxu0
      %v400 = vadd.f32 %v224, %v399
      %v401 = vpop.f32.mrf.mxu0
      %v402 = vadd.f32 %v224, %v401
      %403 = vmatmul.bf16.gmra.mxu0 %v295
      %v404 = vpop.f32.mrf.mxu0
      %v405 = vadd.f32 %v224, %v404
      %v406 = vpop.f32.mrf.mxu0
      %v407 = vadd.f32 %v224, %v406
      %408 = vmatmul.bf16.gmra.mxu0 %v296
      %v409 = vpop.f32.mrf.mxu0
      %v410 = vadd.f32 %v224, %v409
      %v411 = vpop.f32.mrf.mxu0
      %v412 = vadd.f32 %v224, %v411
      %413 = vmatmul.bf16.gmra.mxu0 %v297
      %v414 = vpop.f32.mrf.mxu0
      %v415 = vadd.f32 %v224, %v414
      %v416 = vpop.f32.mrf.mxu0
      %v417 = vadd.f32 %v224, %v416
      %418 = vmatmul.bf16.gmra.mxu0 %v298
      %v419 = vpop.f32.mrf.mxu0
      %v420 = vadd.f32 %v224, %v419
      %v421 = vpop.f32.mrf.mxu0
      %v422 = vadd.f32 %v224, %v421
      %423 = vmatmul.bf16.gmra.mxu0 %v299
      %v424 = vpop.f32.mrf.mxu0
      %v425 = vadd.f32 %v224, %v424
      %v426 = vpop.f32.mrf.mxu0
      %v427 = vadd.f32 %v224, %v426
      %428 = vmatmul.bf16.gmra.mxu0 %v300
      %v429 = vpop.f32.mrf.mxu0
      %v430 = vadd.f32 %v224, %v429
      %v431 = vpop.f32.mrf.mxu0
      %v432 = vadd.f32 %v224, %v431
      %433 = vmatmul.bf16.gmra.mxu0 %v301
      %v434 = vpop.f32.mrf.mxu0
      %v435 = vadd.f32 %v224, %v434
      %v436 = vpop.f32.mrf.mxu0
      %v437 = vadd.f32 %v224, %v436
      %438 = vmatmul.bf16.gmra.mxu0 %v302
      %v439 = vpop.f32.mrf.mxu0
      %v440 = vadd.f32 %v224, %v439
      %v441 = vpop.f32.mrf.mxu0
      %v442 = vadd.f32 %v224, %v441
      %443 = vmatmul.bf16.gmra.mxu0 %v303
      %v444 = vpop.f32.mrf.mxu0
      %v445 = vadd.f32 %v224, %v444
      %v446 = vpop.f32.mrf.mxu0
      %v447 = vadd.f32 %v224, %v446
      %448 = vmatmul.bf16.gmra.mxu0 %v304
      %v449 = vpop.f32.mrf.mxu0
      %v450 = vadd.f32 %v224, %v449
      %v451 = vpop.f32.mrf.mxu0
      %v452 = vadd.f32 %v224, %v451
      %453 = vmatmul.bf16.gmra.mxu0 %v305
      %v454 = vpop.f32.mrf.mxu0
      %v455 = vadd.f32 %v224, %v454
      %v456 = vpop.f32.mrf.mxu0
      %v457 = vadd.f32 %v224, %v456
      %458 = vdwg.mxu0
      %v459 = vmax.f32 %v380, 0.0
      %v460 = vmax.f32 %v382, 0.0
      %v461 = vmax.f32 %v385, 0.0
      %v462 = vmax.f32 %v387, 0.0
      %v463 = vmax.f32 %v390, 0.0
      %v464 = vmax.f32 %v392, 0.0
      %v465 = vmax.f32 %v395, 0.0
      %v466 = vmax.f32 %v397, 0.0
      %v467 = vmax.f32 %v400, 0.0
      %v468 = vmax.f32 %v402, 0.0
      %v469 = vmax.f32 %v405, 0.0
      %v470 = vmax.f32 %v407, 0.0
      %v471 = vmax.f32 %v410, 0.0
      %v472 = vmax.f32 %v412, 0.0
      %v473 = vmax.f32 %v415, 0.0
      %v474 = vmax.f32 %v417, 0.0
      %v475 = vmax.f32 %v420, 0.0
      %v476 = vmax.f32 %v422, 0.0
      %v477 = vmax.f32 %v425, 0.0
      %v478 = vmax.f32 %v427, 0.0
      %v479 = vmax.f32 %v430, 0.0
      %v480 = vmax.f32 %v432, 0.0
      %v481 = vmax.f32 %v435, 0.0
      %v482 = vmax.f32 %v437, 0.0
      %v483 = vmax.f32 %v440, 0.0
      %v484 = vmax.f32 %v442, 0.0
      %v485 = vmax.f32 %v445, 0.0
      %v486 = vmax.f32 %v447, 0.0
      %v487 = vmax.f32 %v450, 0.0
      %v488 = vmax.f32 %v452, 0.0
      %v489 = vmax.f32 %v455, 0.0
      %v490 = vmax.f32 %v457, 0.0
      %v491 = vpack.c.bf16 %v459, %v459
      %v492 = vpack.c.bf16 %v460, %v460
      %v493 = vpack.c.bf16 %v461, %v461
      %v494 = vpack.c.bf16 %v462, %v462
      %v495 = vpack.c.bf16 %v463, %v463
      %v496 = vpack.c.bf16 %v464, %v464
      %v497 = vpack.c.bf16 %v465, %v465
      %v498 = vpack.c.bf16 %v466, %v466
      %v499 = vpack.c.bf16 %v467, %v467
      %v500 = vpack.c.bf16 %v468, %v468
      %v501 = vpack.c.bf16 %v469, %v469
      %v502 = vpack.c.bf16 %v470, %v470
      %v503 = vpack.c.bf16 %v471, %v471
      %v504 = vpack.c.bf16 %v472, %v472
      %v505 = vpack.c.bf16 %v473, %v473
      %v506 = vpack.c.bf16 %v474, %v474
      %v507 = vpack.c.bf16 %v475, %v475
      %v508 = vpack.c.bf16 %v476, %v476
      %v509 = vpack.c.bf16 %v477, %v477
      %v510 = vpack.c.bf16 %v478, %v478
      %v511 = vpack.c.bf16 %v479, %v479
      %v512 = vpack.c.bf16 %v480, %v480
      %v513 = vpack.c.bf16 %v481, %v481
      %v514 = vpack.c.bf16 %v482, %v482
      %v515 = vpack.c.bf16 %v483, %v483
      %v516 = vpack.c.bf16 %v484, %v484
      %v517 = vpack.c.bf16 %v485, %v485
      %v518 = vpack.c.bf16 %v486, %v486
      %v519 = vpack.c.bf16 %v487, %v487
      %v520 = vpack.c.bf16 %v488, %v488
      %v521 = vpack.c.bf16 %v489, %v489
      %v522 = vpack.c.bf16 %v490, %v490
      %523 = vst [vmem:[%s172] sm:$0xf] %v491
      %524 = vst [vmem:[%s172 + $0x4] sm:$0xf] %v492
      %525 = vst [vmem:[%s172 + $0x8] sm:$0xf] %v493
      %526 = vst [vmem:[%s172 + $0xc] sm:$0xf] %v494
      %527 = vst [vmem:[%s172 + $0x10] sm:$0xf] %v495
      %528 = vst [vmem:[%s172 + $0x14] sm:$0xf] %v496
      %529 = vst [vmem:[%s172 + $0x18] sm:$0xf] %v497
      %530 = vst [vmem:[%s172 + $0x1c] sm:$0xf] %v498
      %531 = vst [vmem:[%s172 + $0x20] sm:$0xf] %v499
      %532 = vst [vmem:[%s172 + $0x24] sm:$0xf] %v500
      %533 = vst [vmem:[%s172 + $0x28] sm:$0xf] %v501
      %534 = vst [vmem:[%s172 + $0x2c] sm:$0xf] %v502
      %535 = vst [vmem:[%s172 + $0x30] sm:$0xf] %v503
      %536 = vst [vmem:[%s172 + $0x34] sm:$0xf] %v504
      %537 = vst [vmem:[%s172 + $0x38] sm:$0xf] %v505
      %538 = vst [vmem:[%s172 + $0x3c] sm:$0xf] %v506
      %539 = vst [vmem:[%s172 + $0x40] sm:$0xf] %v507
      %540 = vst [vmem:[%s172 + $0x44] sm:$0xf] %v508
      %541 = vst [vmem:[%s172 + $0x48] sm:$0xf] %v509
      %542 = vst [vmem:[%s172 + $0x4c] sm:$0xf] %v510
      %543 = vst [vmem:[%s172 + $0x50] sm:$0xf] %v511
      %544 = vst [vmem:[%s172 + $0x54] sm:$0xf] %v512
      %545 = vst [vmem:[%s172 + $0x58] sm:$0xf] %v513
      %546 = vst [vmem:[%s172 + $0x5c] sm:$0xf] %v514
      %547 = vst [vmem:[%s172 + $0x60] sm:$0xf] %v515
      %548 = vst [vmem:[%s172 + $0x64] sm:$0xf] %v516
      %549 = vst [vmem:[%s172 + $0x68] sm:$0xf] %v517
      %550 = vst [vmem:[%s172 + $0x6c] sm:$0xf] %v518
      %551 = vst [vmem:[%s172 + $0x70] sm:$0xf] %v519
      %552 = vst [vmem:[%s172 + $0x74] sm:$0xf] %v520
      %553 = vst [vmem:[%s172 + $0x78] sm:$0xf] %v521
      %554 = vst [vmem:[%s172 + $0x7c] sm:$0xf] %v522
      %s555 = smul.u32 32, %s14
      %p556 = scmp.lt.s32.totalorder %s555, 63
      %s557 = scalar_select %p556, %s555, 63
      %s558 = smul.addr %s557, 4
      %s559 = scalar_lea.vmem %s3, %s558
      // Predicated region
      $region33: #{_traced_forward.3} parent=31 // pred_check
        %p560 = pneg %p100
      $region34: #{_traced_forward.3} parent=31 // pred_check_branch
        %562 = sbr.rel (%p560) target = $region36
      $region35: #{_traced_forward.3} parent=31 // pred_region
        %s563 = smul.u32 32, %s14
      $region36: #{_traced_forward.3} parent=31 // pred_fallthru
        _
    $region32: #{_traced_forward.3} parent=5 // pred_fallthru
      _
    %p564 = scmp.le.s32.totalorder 2, %s9
    // Predicated region
    $region37: #{_traced_forward.3} parent=5 // pred_check
      %p565 = pneg %p564
    $region38: #{_traced_forward.3} parent=5 // pred_check_branch
      %567 = sbr.rel (%p565) target = $region40
    $region39: #{_traced_forward.3} parent=5 // pred_region
      %s568 = ssub.s32 %s9, 2
      // Predicated region
      $region41: #{_traced_forward.3} parent=39 // pred_check
        %p569 = pneg %p106
      $region42: #{_traced_forward.3} parent=39 // pred_check_branch
        %571 = sbr.rel (%p569) target = $region44
      $region43: #{_traced_forward.3} parent=39 // pred_region
        %s572 = smul.u32 32, %s15
        %p573 = scmp.lt.s32.totalorder %s572, 63
        %s574 = scalar_select %p573, %s572, 63
        %s575 = smul.addr %s574, 4
        %s576 = scalar_lea.vmem %s3, %s575
      $region44: #{_traced_forward.3} parent=39 // pred_fallthru
        _
    $region40: #{_traced_forward.3} parent=5 // pred_fallthru
      _
  $region6: #{_traced_forward.3} parent=0 // loop_footer
    %s13 = sadd.s32 1, %s9
  $region7: #{_traced_forward.3} parent=0 // loop_footer_branch
    %8 = sbr.rel target = $region3
  $region8: #{_traced_forward.3} parent=0 // loop_exit
    _

// kernel: _traced_forward.5
$region0: #{_traced_forward.5}
  #allocation0 [shape = 'u32[]', space=smem, size = 0x4, offset = 0x4, fixed_abs, tag = 'smem constant byte address 0x4 - core index']
  #allocation1 [shape = 'u32[72,128]{1,0:T(1,128)}', space=vmem, size = 0x9000, scoped, tag = 'internal scratch']
  %s0 = inlined_call_operand.vmem [shape: bf16[16,8,8], index: 0, kind: input, shape index: {}]
  %s1 = inlined_call_operand.vmem [shape: bf16[8,16], index: 1, kind: input, shape index: {}]
  %s2 = inlined_call_operand.vmem [shape: bf16[16,8], index: 2, kind: input, shape index: {}]
  %s3 = inlined_call_operand.hbm [shape: f32[16,16,16], index: 3, kind: output, shape index: {}]
  %s4 = sld [smem:[#allocation0]]
  $region45: #{_traced_forward.5} parent=0
    _
  %s6 = ssub.s32 1, %s4
  %s7 = scalar_select 0, %s6, %s4
  $region1: #{_traced_forward.5} parent=0
    #allocation2 [shape = 'u8[131072]{0}', space=vmem, size = 0x20000, scoped, tag = 'output window, operand 0']
    #allocation3 [shape = 's32[2]{0}', space=sflag, size = 0x8, scoped, tag = 'scoped memory for _traced_forward.5']
    %8 = vsyncpa [#allocation3], 0
    %s9 = scalar_lea.sflag [#allocation3], 1
    %10 = vsyncpa %s9, 0
    loop: start=0, step=1, limit=4
    $region2: #{_traced_forward.5} parent=1 // loop_pre_header
      _
    $region3: #{_traced_forward.5} parent=1 // loop_header
      %s12 = sphi 0, %s16
      %p13 = scmp.ge.s32.totalorder %s12, 4
      %s22 = sphi 0, %s24
      %s25 = sphi 0, %s22
      %s26 = sphi 0, %s25
      %s42 = sphi 0, %s26
      %s46 = sphi 0, %s46
      %s48 = sphi 0, %s46
      %s49 = sphi 0, %s48
      %s63 = sphi 0, %s49
      %s67 = sphi 0, %s67
      %s69 = sphi 0, %s67
      %s70 = sphi 0, %s69
      %s84 = sphi 0, %s70
      %s90 = sphi 0, %s92
      %s93 = sphi 0, %s90
      %s94 = sphi 0, %s93
      %s110 = sphi 0, %s94
    $region4: #{_traced_forward.5} parent=1 // loop_header_branch
      %15 = sbr.rel (%p13) target = $region8
    $region5: #{_traced_forward.5} parent=1 // loop_body
      %s17 = ssub.s32 %s12, 1
      %s18 = ssub.s32 %s12, 2
      %s19 = sadd.s32 %s12, 1
      %s20 = ssub.s32 %s12, %s19
      %p21 = scmp.eq.s32.totalorder %s20, 0
      %s23 = sadd.s32 %s22, 1
      %s24 = scalar_select %p21, %s22, %s23
      %p27 = pneg %p21
      %p28 = scmp.eq.s32.totalorder %s12, 1
      %p29 = por %p27, %p28
      %p30 = scmp.ne.s32.totalorder %s22, %s25
      %p31 = scmp.eq.s32.totalorder %s12, 0
      %p32 = por %p30, %p31
      %p33 = scmp.ne.s32.totalorder %s22, %s25
      %p34 = scmp.eq.s32.totalorder %s17, 1
      %p35 = por %p33, %p34
      %p36 = scmp.ne.s32.totalorder %s25, %s26
      %p37 = scmp.eq.s32.totalorder %s17, 0
      %p38 = por %p36, %p37
      %p39 = scmp.ne.s32.totalorder %s25, %s26
      %p40 = scmp.eq.s32.totalorder %s18, 1
      %p41 = por %p39, %p40
      %p43 = scmp.ne.s32.totalorder %s26, %s42
      %p44 = scmp.eq.s32.totalorder %s18, 0
      %p45 = por %p43, %p44
      %s47 = sadd.s32 %s46, 1
      %p50 = scmp.eq.s32.totalorder %s12, 1
      %p51 = scmp.ne.s32.totalorder %s46, %s48
      %p52 = scmp.eq.s32.totalorder %s12, 0
      %p53 = por %p51, %p52
      %p54 = scmp.ne.s32.totalorder %s46, %s48
      %p55 = scmp.eq.s32.totalorder %s17, 1
      %p56 = por %p54, %p55
      %p57 = scmp.ne.s32.totalorder %s48, %s49
      %p58 = scmp.eq.s32.totalorder %s17, 0
      %p59 = por %p57, %p58
      %p60 = scmp.ne.s32.totalorder %s48, %s49
      %p61 = scmp.eq.s32.totalorder %s18, 1
      %p62 = por %p60, %p61
      %p64 = scmp.ne.s32.totalorder %s49, %s63
      %p65 = scmp.eq.s32.totalorder %s18, 0
      %p66 = por %p64, %p65
      %s68 = sadd.s32 %s67, 1
      %p71 = scmp.eq.s32.totalorder %s12, 1
      %p72 = scmp.ne.s32.totalorder %s67, %s69
      %p73 = scmp.eq.s32.totalorder %s12, 0
      %p74 = por %p72, %p73
      %p75 = scmp.ne.s32.totalorder %s67, %s69
      %p76 = scmp.eq.s32.totalorder %s17, 1
      %p77 = por %p75, %p76
      %p78 = scmp.ne.s32.totalorder %s69, %s70
      %p79 = scmp.eq.s32.totalorder %s17, 0
      %p80 = por %p78, %p79
      %p81 = scmp.ne.s32.totalorder %s69, %s70
      %p82 = scmp.eq.s32.totalorder %s18, 1
      %p83 = por %p81, %p82
      %p85 = scmp.ne.s32.totalorder %s70, %s84
      %p86 = scmp.eq.s32.totalorder %s18, 0
      %p87 = por %p85, %p86
      %s88 = ssub.s32 %s12, %s19
      %p89 = scmp.eq.s32.totalorder %s88, 0
      %s91 = sadd.s32 %s90, 1
      %s92 = scalar_select %p89, %s90, %s91
      %p95 = pneg %p89
      %p96 = scmp.eq.s32.totalorder %s12, 1
      %p97 = por %p95, %p96
      %p98 = scmp.ne.s32.totalorder %s90, %s93
      %p99 = scmp.eq.s32.totalorder %s12, 0
      %p100 = por %p98, %p99
      %p101 = scmp.ne.s32.totalorder %s90, %s93
      %p102 = scmp.eq.s32.totalorder %s17, 1
      %p103 = por %p101, %p102
      %p104 = scmp.ne.s32.totalorder %s93, %s94
      %p105 = scmp.eq.s32.totalorder %s17, 0
      %p106 = por %p104, %p105
      %p107 = scmp.ne.s32.totalorder %s93, %s94
      %p108 = scmp.eq.s32.totalorder %s18, 1
      %p109 = por %p107, %p108
      %p111 = scmp.ne.s32.totalorder %s94, %s110
      %p112 = scmp.eq.s32.totalorder %s18, 0
      %p113 = por %p111, %p112
      %p114 = scmp.le.s32.totalorder 1, %s12
      %p115 = scmp.lt.s32.totalorder %s12, 3
      %p116 = pnand %p114, %p115
      %p117 = pneg %p116
      // Predicated region
      $region9: #{_traced_forward.5} parent=5 // pred_check
        _
      $region10: #{_traced_forward.5} parent=5 // pred_check_branch
        %119 = sbr.rel (%p116) target = $region12
      $region11: #{_traced_forward.5} parent=5 // pred_region
        %s120 = ssub.s32 %s12, 1
        // Predicated region
        $region13: #{_traced_forward.5} parent=11 // pred_check
          %p121 = pneg %p59
        $region14: #{_traced_forward.5} parent=11 // pred_check_branch
          %123 = sbr.rel (%p121) target = $region16
        $region15: #{_traced_forward.5} parent=11 // pred_region
          _
        $region16: #{_traced_forward.5} parent=11 // pred_fallthru
          _
        // Predicated region
        $region17: #{_traced_forward.5} parent=11 // pred_check
          %p124 = pneg %p80
        $region18: #{_traced_forward.5} parent=11 // pred_check_branch
          %126 = sbr.rel (%p124) target = $region20
        $region19: #{_traced_forward.5} parent=11 // pred_region
          _
        $region20: #{_traced_forward.5} parent=11 // pred_fallthru
          _
      $region12: #{_traced_forward.5} parent=5 // pred_fallthru
        _
      %p127 = scmp.lt.s32.totalorder %s12, 2
      // Predicated region
      $region21: #{_traced_forward.5} parent=5 // pred_check
        %p128 = pneg %p127
      $region22: #{_traced_forward.5} parent=5 // pred_check_branch
        %130 = sbr.rel (%p128) target = $region24
      $region23: #{_traced_forward.5} parent=5 // pred_region
        // Predicated region
        $region25: #{_traced_forward.5} parent=23 // pred_check
          %p131 = pneg %p32
        $region26: #{_traced_forward.5} parent=23 // pred_check_branch
          %133 = sbr.rel (%p131) target = $region28
        $region27: #{_traced_forward.5} parent=23 // pred_region
          %s134 = smul.u32 8, %s12
          %p135 = scmp.lt.s32.totalorder %s134, 15
          %s136 = scalar_select %p135, %s134, 15
          %s137 = smul.addr %s136, 4
          %s138 = scalar_lea.vmem %s0, %s137
          %s139 = smul.u32 8, %s12
        $region28: #{_traced_forward.5} parent=23 // pred_fallthru
          _
      $region24: #{_traced_forward.5} parent=5 // pred_fallthru
        _
      %p140 = scmp.le.s32.totalorder 1, %s12
      %p141 = scmp.lt.s32.totalorder %s12, 3
      %p142 = pnand %p140, %p141
      %p143 = pneg %p142
      // Predicated region
      $region29: #{_traced_forward.5} parent=5 // pred_check
        _
      $region30: #{_traced_forward.5} parent=5 // pred_check_branch
        %145 = sbr.rel (%p142) target = $region32
      $region31: #{_traced_forward.5} parent=5 // pred_region
        %s146 = ssub.s32 %s12, 1
        %s147 = smul.u32 8, %s17
        %p148 = scmp.lt.s32.totalorder %s147, 15
        %s149 = scalar_select %p148, %s147, 15
        %s150 = smul.addr %s149, 4
        %s151 = scalar_lea.vmem %s0, %s150
        %p152 = pneg %p38
        %p153 = pneg %p35
        %p154 = pneg %p59
        %p155 = pneg %p56
        %p156 = pneg %p80
        %p157 = pneg %p77
        %p158 = pneg %p106
        %p159 = pneg %p103
        %s160 = sand.u32 %s93, 1
        %s161 = scalar_lea.sflag [#allocation3], %s160
        %s162 = sand.u32 %s93, 1
        %s163 = smul.addr %s162, 128
        %s164 = scalar_lea.vmem [#allocation2], %s163
        %s165 = smul.u32 8, %s17
        %p166 = scmp.lt.s32.totalorder %s165, 15
        %s167 = scalar_select %p166, %s165, 15
        %s168 = smul.addr %s167, 4
        %s169 = scalar_lea.vmem %s0, %s168
        %s170 = smul.u32 8, %s17
        %s171 = smul.u32 8, %s17
        %v173 = vld [vmem:[%s169] sm:$0xf]
        %v174 = vld [vmem:[%s169 + $0x4] sm:$0xf]
        %v175 = vld [vmem:[%s169 + $0x8] sm:$0xf]
        %v176 = vld [vmem:[%s169 + $0xc] sm:$0xf]
        %v177 = vld [vmem:[%s169 + $0x10] sm:$0xf]
        %v178 = vld [vmem:[%s169 + $0x14] sm:$0xf]
        %v179 = vld [vmem:[%s169 + $0x18] sm:$0xf]
        %v180 = vld [vmem:[%s169 + $0x1c] sm:$0xf]
        %v181 = vld [vmem:[%s1] sm:$0xf]
        %vm182 = vcmask 64512
        %v184 = vsel %vm182, %v173, 0
        %vm186 = vcmask 1043456
        %v188 = vsel %vm186, %v181, 0
        %190 = vmatpush.bf16.msra.mxu0 0
        %191 = vmatpush.bf16.msra.mxu0 0
        %192 = vmatpush.bf16.msra.mxu0 0
        %193 = vmatpush.bf16.msra.mxu0 0
        %194 = vmatpush.bf16.msra.mxu0 0
        %195 = vmatpush.bf16.msra.mxu0 0
        %196 = vmatpush.bf16.msra.mxu0 0
        %197 = vmatpush.bf16.msra.mxu0 %v188
        %198 = vmatmul.bf16.gmra.mxu0 %v184
        %v199 = vpop.f32.mrf.mxu0
        %v200 = vadd.f32 0.0, %v199
        %v201 = vpop.f32.mrf.mxu0
        %202 = vdwg.mxu0
        %v204 = vsel %vm182, %v174, 0
        %206 = vmatpush.bf16.msra.mxu0 0
        %207 = vmatpush.bf16.msra.mxu0 0
        %208 = vmatpush.bf16.msra.mxu0 0
        %209 = vmatpush.bf16.msra.mxu0 0
        %210 = vmatpush.bf16.msra.mxu0 0
        %211 = vmatpush.bf16.msra.mxu0 0
        %212 = vmatpush.bf16.msra.mxu0 0
        %213 = vmatpush.bf16.msra.mxu0 %v188
        %214 = vmatmul.bf16.gmra.mxu0 %v204
        %v215 = vpop.f32.mrf.mxu0
        %v216 = vadd.f32 0.0, %v215
        %v217 = vpop.f32.mrf.mxu0
        %218 = vdwg.mxu0
        %v220 = vsel %vm182, %v175, 0
        %222 = vmatpush.bf16.msra.mxu0 0
        %223 = vmatpush.bf16.msra.mxu0 0
        %224 = vmatpush.bf16.msra.mxu0 0
        %225 = vmatpush.bf16.msra.mxu0 0
        %226 = vmatpush.bf16.msra.mxu0 0
        %227 = vmatpush.bf16.msra.mxu0 0
        %228 = vmatpush.bf16.msra.mxu0 0
        %229 = vmatpush.bf16.msra.mxu0 %v188
        %230 = vmatmul.bf16.gmra.mxu0 %v220
        %v231 = vpop.f32.mrf.mxu0
        %v232 = vadd.f32 0.0, %v231
        %v233 = vpop.f32.mrf.mxu0
        %234 = vdwg.mxu0
        %v236 = vsel %vm182, %v176, 0
        %238 = vmatpush.bf16.msra.mxu0 0
        %239 = vmatpush.bf16.msra.mxu0 0
        %240 = vmatpush.bf16.msra.mxu0 0
        %241 = vmatpush.bf16.msra.mxu0 0
        %242 = vmatpush.bf16.msra.mxu0 0
        %243 = vmatpush.bf16.msra.mxu0 0
        %244 = vmatpush.bf16.msra.mxu0 0
        %245 = vmatpush.bf16.msra.mxu0 %v188
        %246 = vmatmul.bf16.gmra.mxu0 %v236
        %v247 = vpop.f32.mrf.mxu0
        %v248 = vadd.f32 0.0, %v247
        %v249 = vpop.f32.mrf.mxu0
        %250 = vdwg.mxu0
        %v252 = vsel %vm182, %v177, 0
        %254 = vmatpush.bf16.msra.mxu0 0
        %255 = vmatpush.bf16.msra.mxu0 0
        %256 = vmatpush.bf16.msra.mxu0 0
        %257 = vmatpush.bf16.msra.mxu0 0
        %258 = vmatpush.bf16.msra.mxu0 0
        %259 = vmatpush.bf16.msra.mxu0 0
        %260 = vmatpush.bf16.msra.mxu0 0
        %261 = vmatpush.bf16.msra.mxu0 %v188
        %262 = vmatmul.bf16.gmra.mxu0 %v252
        %v263 = vpop.f32.mrf.mxu0
        %v264 = vadd.f32 0.0, %v263
        %v265 = vpop.f32.mrf.mxu0
        %266 = vdwg.mxu0
        %v268 = vsel %vm182, %v178, 0
        %270 = vmatpush.bf16.msra.mxu0 0
        %271 = vmatpush.bf16.msra.mxu0 0
        %272 = vmatpush.bf16.msra.mxu0 0
        %273 = vmatpush.bf16.msra.mxu0 0
        %274 = vmatpush.bf16.msra.mxu0 0
        %275 = vmatpush.bf16.msra.mxu0 0
        %276 = vmatpush.bf16.msra.mxu0 0
        %277 = vmatpush.bf16.msra.mxu0 %v188
        %278 = vmatmul.bf16.gmra.mxu0 %v268
        %v279 = vpop.f32.mrf.mxu0
        %v280 = vadd.f32 0.0, %v279
        %v281 = vpop.f32.mrf.mxu0
        %282 = vdwg.mxu0
        %v284 = vsel %vm182, %v179, 0
        %286 = vmatpush.bf16.msra.mxu0 0
        %287 = vmatpush.bf16.msra.mxu0 0
        %288 = vmatpush.bf16.msra.mxu0 0
        %289 = vmatpush.bf16.msra.mxu0 0
        %290 = vmatpush.bf16.msra.mxu0 0
        %291 = vmatpush.bf16.msra.mxu0 0
        %292 = vmatpush.bf16.msra.mxu0 0
        %293 = vmatpush.bf16.msra.mxu0 %v188
        %294 = vmatmul.bf16.gmra.mxu0 %v284
        %v295 = vpop.f32.mrf.mxu0
        %v296 = vadd.f32 0.0, %v295
        %v297 = vpop.f32.mrf.mxu0
        %298 = vdwg.mxu0
        %v300 = vsel %vm182, %v180, 0
        %302 = vmatpush.bf16.msra.mxu0 0
        %303 = vmatpush.bf16.msra.mxu0 0
        %304 = vmatpush.bf16.msra.mxu0 0
        %305 = vmatpush.bf16.msra.mxu0 0
        %306 = vmatpush.bf16.msra.mxu0 0
        %307 = vmatpush.bf16.msra.mxu0 0
        %308 = vmatpush.bf16.msra.mxu0 0
        %309 = vmatpush.bf16.msra.mxu0 %v188
        %310 = vmatmul.bf16.gmra.mxu0 %v300
        %v311 = vpop.f32.mrf.mxu0
        %v312 = vadd.f32 0.0, %v311
        %v313 = vpop.f32.mrf.mxu0
        %314 = vdwg.mxu0
        %v315 = vld [vmem:[%s2] sm:$0xf]
        %v316 = vld [vmem:[%s2 + $0x4] sm:$0xf]
        %v317 = vpack.c.bf16 %v200, %v200
        %v318 = vpack.c.bf16 %v216, %v216
        %v319 = vpack.c.bf16 %v232, %v232
        %v320 = vpack.c.bf16 %v248, %v248
        %v321 = vpack.c.bf16 %v264, %v264
        %v322 = vpack.c.bf16 %v280, %v280
        %v323 = vpack.c.bf16 %v296, %v296
        %v324 = vpack.c.bf16 %v312, %v312
        %v327 = vunpack.c.l.b16 %v315
        %v328 = vunpack.c.l.b16 %v316
        %v329 = vpack.c.b16 %v328, %v327
        %v331 = vsel %vm182, %v329, 0
        %v334 = vsel %vm186, %v317, 0
        %336 = vmatpush.bf16.msra.mxu0 0
        %337 = vmatpush.bf16.msra.mxu0 0
        %338 = vmatpush.bf16.msra.mxu0 0
        %339 = vmatpush.bf16.msra.mxu0 0
        %340 = vmatpush.bf16.msra.mxu0 0
        %341 = vmatpush.bf16.msra.mxu0 0
        %342 = vmatpush.bf16.msra.mxu0 0
        %343 = vmatpush.bf16.msra.mxu0 %v334
        %344 = vmatmul.bf16.gmra.mxu0 %v331
        %v345 = vpop.f32.mrf.mxu0
        %v346 = vadd.f32 0.0, %v345
        %v347 = vpop.f32.mrf.mxu0
        %v348 = vadd.f32 0.0, %v347
        %349 = vdwg.mxu0
        %v351 = vsel %vm186, %v318, 0
        %353 = vmatpush.bf16.msra.mxu0 0
        %354 = vmatpush.bf16.msra.mxu0 0
        %355 = vmatpush.bf16.msra.mxu0 0
        %356 = vmatpush.bf16.msra.mxu0 0
        %357 = vmatpush.bf16.msra.mxu0 0
        %358 = vmatpush.bf16.msra.mxu0 0
        %359 = vmatpush.bf16.msra.mxu0 0
        %360 = vmatpush.bf16.msra.mxu0 %v351
        %361 = vmatmul.bf16.gmra.mxu0 %v331
        %v362 = vpop.f32.mrf.mxu0
        %v363 = vadd.f32 0.0, %v362
        %v364 = vpop.f32.mrf.mxu0
        %v365 = vadd.f32 0.0, %v364
        %366 = vdwg.mxu0
        %v368 = vsel %vm186, %v319, 0
        %370 = vmatpush.bf16.msra.mxu0 0
        %371 = vmatpush.bf16.msra.mxu0 0
        %372 = vmatpush.bf16.msra.mxu0 0
        %373 = vmatpush.bf16.msra.mxu0 0
        %374 = vmatpush.bf16.msra.mxu0 0
        %375 = vmatpush.bf16.msra.mxu0 0
        %376 = vmatpush.bf16.msra.mxu0 0
        %377 = vmatpush.bf16.msra.mxu0 %v368
        %378 = vmatmul.bf16.gmra.mxu0 %v331
        %v379 = vpop.f32.mrf.mxu0
        %v380 = vadd.f32 0.0, %v379
        %v381 = vpop.f32.mrf.mxu0
        %v382 = vadd.f32 0.0, %v381
        %383 = vdwg.mxu0
        %v385 = vsel %vm186, %v320, 0
        %387 = vmatpush.bf16.msra.mxu0 0
        %388 = vmatpush.bf16.msra.mxu0 0
        %389 = vmatpush.bf16.msra.mxu0 0
        %390 = vmatpush.bf16.msra.mxu0 0
        %391 = vmatpush.bf16.msra.mxu0 0
        %392 = vmatpush.bf16.msra.mxu0 0
        %393 = vmatpush.bf16.msra.mxu0 0
        %394 = vmatpush.bf16.msra.mxu0 %v385
        %395 = vmatmul.bf16.gmra.mxu0 %v331
        %v396 = vpop.f32.mrf.mxu0
        %v397 = vadd.f32 0.0, %v396
        %v398 = vpop.f32.mrf.mxu0
        %v399 = vadd.f32 0.0, %v398
        %400 = vdwg.mxu0
        %v402 = vsel %vm186, %v321, 0
        %404 = vmatpush.bf16.msra.mxu0 0
        %405 = vmatpush.bf16.msra.mxu0 0
        %406 = vmatpush.bf16.msra.mxu0 0
        %407 = vmatpush.bf16.msra.mxu0 0
        %408 = vmatpush.bf16.msra.mxu0 0
        %409 = vmatpush.bf16.msra.mxu0 0
        %410 = vmatpush.bf16.msra.mxu0 0
        %411 = vmatpush.bf16.msra.mxu0 %v402
        %412 = vmatmul.bf16.gmra.mxu0 %v331
        %v413 = vpop.f32.mrf.mxu0
        %v414 = vadd.f32 0.0, %v413
        %v415 = vpop.f32.mrf.mxu0
        %v416 = vadd.f32 0.0, %v415
        %417 = vdwg.mxu0
        %v419 = vsel %vm186, %v322, 0
        %421 = vmatpush.bf16.msra.mxu0 0
        %422 = vmatpush.bf16.msra.mxu0 0
        %423 = vmatpush.bf16.msra.mxu0 0
        %424 = vmatpush.bf16.msra.mxu0 0
        %425 = vmatpush.bf16.msra.mxu0 0
        %426 = vmatpush.bf16.msra.mxu0 0
        %427 = vmatpush.bf16.msra.mxu0 0
        %428 = vmatpush.bf16.msra.mxu0 %v419
        %429 = vmatmul.bf16.gmra.mxu0 %v331
        %v430 = vpop.f32.mrf.mxu0
        %v431 = vadd.f32 0.0, %v430
        %v432 = vpop.f32.mrf.mxu0
        %v433 = vadd.f32 0.0, %v432
        %434 = vdwg.mxu0
        %v436 = vsel %vm186, %v323, 0
        %438 = vmatpush.bf16.msra.mxu0 0
        %439 = vmatpush.bf16.msra.mxu0 0
        %440 = vmatpush.bf16.msra.mxu0 0
        %441 = vmatpush.bf16.msra.mxu0 0
        %442 = vmatpush.bf16.msra.mxu0 0
        %443 = vmatpush.bf16.msra.mxu0 0
        %444 = vmatpush.bf16.msra.mxu0 0
        %445 = vmatpush.bf16.msra.mxu0 %v436
        %446 = vmatmul.bf16.gmra.mxu0 %v331
        %v447 = vpop.f32.mrf.mxu0
        %v448 = vadd.f32 0.0, %v447
        %v449 = vpop.f32.mrf.mxu0
        %v450 = vadd.f32 0.0, %v449
        %451 = vdwg.mxu0
        %v453 = vsel %vm186, %v324, 0
        %455 = vmatpush.bf16.msra.mxu0 0
        %456 = vmatpush.bf16.msra.mxu0 0
        %457 = vmatpush.bf16.msra.mxu0 0
        %458 = vmatpush.bf16.msra.mxu0 0
        %459 = vmatpush.bf16.msra.mxu0 0
        %460 = vmatpush.bf16.msra.mxu0 0
        %461 = vmatpush.bf16.msra.mxu0 0
        %462 = vmatpush.bf16.msra.mxu0 %v453
        %463 = vmatmul.bf16.gmra.mxu0 %v331
        %v464 = vpop.f32.mrf.mxu0
        %v465 = vadd.f32 0.0, %v464
        %v466 = vpop.f32.mrf.mxu0
        %v467 = vadd.f32 0.0, %v466
        %468 = vdwg.mxu0
        %vm469 = vcmask 130048
        %470 = vst.msk [vmem:[%s164] sm:$0xff] %vm469, %v346
        %471 = vst.msk [vmem:[%s164 + $0x8] sm:$0xff] %vm469, %v348
        %472 = vst.msk [vmem:[%s164 + $0x10] sm:$0xff] %vm469, %v363
        %473 = vst.msk [vmem:[%s164 + $0x18] sm:$0xff] %vm469, %v365
        %474 = vst.msk [vmem:[%s164 + $0x20] sm:$0xff] %vm469, %v380
        %475 = vst.msk [vmem:[%s164 + $0x28] sm:$0xff] %vm469, %v382
        %476 = vst.msk [vmem:[%s164 + $0x30] sm:$0xff] %vm469, %v397
        %477 = vst.msk [vmem:[%s164 + $0x38] sm:$0xff] %vm469, %v399
        %478 = vst.msk [vmem:[%s164 + $0x40] sm:$0xff] %vm469, %v414
        %479 = vst.msk [vmem:[%s164 + $0x48] sm:$0xff] %vm469, %v416
        %480 = vst.msk [vmem:[%s164 + $0x50] sm:$0xff] %vm469, %v431
        %481 = vst.msk [vmem:[%s164 + $0x58] sm:$0xff] %vm469, %v433
        %482 = vst.msk [vmem:[%s164 + $0x60] sm:$0xff] %vm469, %v448
        %483 = vst.msk [vmem:[%s164 + $0x68] sm:$0xff] %vm469, %v450
        %484 = vst.msk [vmem:[%s164 + $0x70] sm:$0xff] %vm469, %v465
        %485 = vst.msk [vmem:[%s164 + $0x78] sm:$0xff] %vm469, %v467
        %s486 = sand.u32 %s93, 1
        %s487 = scalar_lea.sflag [#allocation3], %s486
        %s488 = sand.u32 %s93, 1
        %s489 = smul.addr %s488, 128
        %s490 = scalar_lea.vmem [#allocation2], %s489
        // Predicated region
        $region33: #{_traced_forward.5} parent=31 // pred_check
          %p491 = pneg %p103
        $region34: #{_traced_forward.5} parent=31 // pred_check_branch
          %493 = sbr.rel (%p491) target = $region36
        $region35: #{_traced_forward.5} parent=31 // pred_region
          %s494 = smul.u32 8, %s17
          %496 = vsyncadd %s487, 0
          %s497 = smul.addr %s494, 2
          %s498 = smul.addr %s497, 8
          %s499 = scalar_lea.hbm %s3, %s498
          %s500 = sshll.u32 %s490, 4
          %s501 = int_to_ptr.vmem [resolvable:$true] %s500
          %s502 = sshll.u32 %s499, 4
          %s503 = int_to_ptr.hbm [resolvable:$true] %s502
          %508 = dma.vmem_to_hbm [thread:$0]  %s501, 2048, %s503, %s487, 128, 128, 8
        $region36: #{_traced_forward.5} parent=31 // pred_fallthru
          _
      $region32: #{_traced_forward.5} parent=5 // pred_fallthru
        _
      %p509 = scmp.le.s32.totalorder 2, %s12
      // Predicated region
      $region37: #{_traced_forward.5} parent=5 // pred_check
        %p510 = pneg %p509
      $region38: #{_traced_forward.5} parent=5 // pred_check_branch
        %512 = sbr.rel (%p510) target = $region40
      $region39: #{_traced_forward.5} parent=5 // pred_region
        %s513 = ssub.s32 %s12, 2
        // Predicated region
        $region41: #{_traced_forward.5} parent=39 // pred_check
          %p514 = pneg %p109
        $region42: #{_traced_forward.5} parent=39 // pred_check_branch
          %516 = sbr.rel (%p514) target = $region44
        $region43: #{_traced_forward.5} parent=39 // pred_region
          %s517 = sand.u32 %s94, 1
          %s518 = scalar_lea.sflag [#allocation3], %s517
          %s519 = sand.u32 %s94, 1
          %s520 = smul.addr %s519, 128
          %s521 = scalar_lea.vmem [#allocation2], %s520
          %523 = dma.done %s518, 2048
        $region44: #{_traced_forward.5} parent=39 // pred_fallthru
          _
      $region40: #{_traced_forward.5} parent=5 // pred_fallthru
        _
    $region6: #{_traced_forward.5} parent=1 // loop_footer
      %s16 = sadd.s32 1, %s12
    $region7: #{_traced_forward.5} parent=1 // loop_footer_branch
      %11 = sbr.rel target = $region3
    $region8: #{_traced_forward.5} parent=1 // loop_exit
      _
    %524 = vsyncpa [#allocation3], 1
    %s525 = scalar_lea.sflag [#allocation3], 1
    %526 = vsyncpa %s525, 1

// kernel: _traced_forward.4
$region0: #{_traced_forward.4}
  #allocation0 [shape = 'u32[]', space=smem, size = 0x4, offset = 0x4, fixed_abs, tag = 'smem constant byte address 0x4 - core index']
  #allocation1 [shape = 'u32[72,128]{1,0:T(1,128)}', space=vmem, size = 0x9000, scoped, tag = 'internal scratch']
  %s0 = inlined_call_operand.vmem [shape: bf16[128,1152], index: 0, kind: input, shape index: {}]
  %s1 = inlined_call_operand.vmem [shape: bf16[1152,128], index: 1, kind: input, shape index: {}]
  %s2 = inlined_call_operand.vmem [shape: f32[1,128], index: 2, kind: input, shape index: {}]
  %s3 = inlined_call_operand.vmem [shape: bf16[128,128], index: 3, kind: output, shape index: {}]
  %s4 = sld [smem:[#allocation0]]
  $region45: #{_traced_forward.4} parent=0
    _
  %s6 = ssub.s32 1, %s4
  %s7 = scalar_select 0, %s6, %s4
  loop: start=0, step=1, limit=4
  $region2: #{_traced_forward.4} parent=0 // loop_pre_header
    _
  $region3: #{_traced_forward.4} parent=0 // loop_header
    %s9 = sphi 0, %s13
    %p10 = scmp.ge.s32.totalorder %s9, 4
    %s19 = sphi 0, %s21
    %s22 = sphi 0, %s19
    %s23 = sphi 0, %s22
    %s39 = sphi 0, %s23
    %s43 = sphi 0, %s43
    %s45 = sphi 0, %s43
    %s46 = sphi 0, %s45
    %s60 = sphi 0, %s46
    %s64 = sphi 0, %s64
    %s66 = sphi 0, %s64
    %s67 = sphi 0, %s66
    %s81 = sphi 0, %s67
    %s87 = sphi 0, %s89
    %s90 = sphi 0, %s87
    %s91 = sphi 0, %s90
    %s107 = sphi 0, %s91
  $region4: #{_traced_forward.4} parent=0 // loop_header_branch
    %12 = sbr.rel (%p10) target = $region8
  $region5: #{_traced_forward.4} parent=0 // loop_body
    %s14 = ssub.s32 %s9, 1
    %s15 = ssub.s32 %s9, 2
    %s16 = sadd.s32 %s9, 1
    %s17 = ssub.s32 %s9, %s16
    %p18 = scmp.eq.s32.totalorder %s17, 0
    %s20 = sadd.s32 %s19, 1
    %s21 = scalar_select %p18, %s19, %s20
    %p24 = pneg %p18
    %p25 = scmp.eq.s32.totalorder %s9, 1
    %p26 = por %p24, %p25
    %p27 = scmp.ne.s32.totalorder %s19, %s22
    %p28 = scmp.eq.s32.totalorder %s9, 0
    %p29 = por %p27, %p28
    %p30 = scmp.ne.s32.totalorder %s19, %s22
    %p31 = scmp.eq.s32.totalorder %s14, 1
    %p32 = por %p30, %p31
    %p33 = scmp.ne.s32.totalorder %s22, %s23
    %p34 = scmp.eq.s32.totalorder %s14, 0
    %p35 = por %p33, %p34
    %p36 = scmp.ne.s32.totalorder %s22, %s23
    %p37 = scmp.eq.s32.totalorder %s15, 1
    %p38 = por %p36, %p37
    %p40 = scmp.ne.s32.totalorder %s23, %s39
    %p41 = scmp.eq.s32.totalorder %s15, 0
    %p42 = por %p40, %p41
    %s44 = sadd.s32 %s43, 1
    %p47 = scmp.eq.s32.totalorder %s9, 1
    %p48 = scmp.ne.s32.totalorder %s43, %s45
    %p49 = scmp.eq.s32.totalorder %s9, 0
    %p50 = por %p48, %p49
    %p51 = scmp.ne.s32.totalorder %s43, %s45
    %p52 = scmp.eq.s32.totalorder %s14, 1
    %p53 = por %p51, %p52
    %p54 = scmp.ne.s32.totalorder %s45, %s46
    %p55 = scmp.eq.s32.totalorder %s14, 0
    %p56 = por %p54, %p55
    %p57 = scmp.ne.s32.totalorder %s45, %s46
    %p58 = scmp.eq.s32.totalorder %s15, 1
    %p59 = por %p57, %p58
    %p61 = scmp.ne.s32.totalorder %s46, %s60
    %p62 = scmp.eq.s32.totalorder %s15, 0
    %p63 = por %p61, %p62
    %s65 = sadd.s32 %s64, 1
    %p68 = scmp.eq.s32.totalorder %s9, 1
    %p69 = scmp.ne.s32.totalorder %s64, %s66
    %p70 = scmp.eq.s32.totalorder %s9, 0
    %p71 = por %p69, %p70
    %p72 = scmp.ne.s32.totalorder %s64, %s66
    %p73 = scmp.eq.s32.totalorder %s14, 1
    %p74 = por %p72, %p73
    %p75 = scmp.ne.s32.totalorder %s66, %s67
    %p76 = scmp.eq.s32.totalorder %s14, 0
    %p77 = por %p75, %p76
    %p78 = scmp.ne.s32.totalorder %s66, %s67
    %p79 = scmp.eq.s32.totalorder %s15, 1
    %p80 = por %p78, %p79
    %p82 = scmp.ne.s32.totalorder %s67, %s81
    %p83 = scmp.eq.s32.totalorder %s15, 0
    %p84 = por %p82, %p83
    %s85 = ssub.s32 %s9, %s16
    %p86 = scmp.eq.s32.totalorder %s85, 0
    %s88 = sadd.s32 %s87, 1
    %s89 = scalar_select %p86, %s87, %s88
    %p92 = pneg %p86
    %p93 = scmp.eq.s32.totalorder %s9, 1
    %p94 = por %p92, %p93
    %p95 = scmp.ne.s32.totalorder %s87, %s90
    %p96 = scmp.eq.s32.totalorder %s9, 0
    %p97 = por %p95, %p96
    %p98 = scmp.ne.s32.totalorder %s87, %s90
    %p99 = scmp.eq.s32.totalorder %s14, 1
    %p100 = por %p98, %p99
    %p101 = scmp.ne.s32.totalorder %s90, %s91
    %p102 = scmp.eq.s32.totalorder %s14, 0
    %p103 = por %p101, %p102
    %p104 = scmp.ne.s32.totalorder %s90, %s91
    %p105 = scmp.eq.s32.totalorder %s15, 1
    %p106 = por %p104, %p105
    %p108 = scmp.ne.s32.totalorder %s91, %s107
    %p109 = scmp.eq.s32.totalorder %s15, 0
    %p110 = por %p108, %p109
    %p111 = scmp.le.s32.totalorder 1, %s9
    %p112 = scmp.lt.s32.totalorder %s9, 3
    %p113 = pnand %p111, %p112
    %p114 = pneg %p113
    // Predicated region
    $region9: #{_traced_forward.4} parent=5 // pred_check
      _
    $region10: #{_traced_forward.4} parent=5 // pred_check_branch
      %116 = sbr.rel (%p113) target = $region12
    $region11: #{_traced_forward.4} parent=5 // pred_region
      %s117 = ssub.s32 %s9, 1
      // Predicated region
      $region13: #{_traced_forward.4} parent=11 // pred_check
        %p118 = pneg %p56
      $region14: #{_traced_forward.4} parent=11 // pred_check_branch
        %120 = sbr.rel (%p118) target = $region16
      $region15: #{_traced_forward.4} parent=11 // pred_region
        _
      $region16: #{_traced_forward.4} parent=11 // pred_fallthru
        _
      // Predicated region
      $region17: #{_traced_forward.4} parent=11 // pred_check
        %p121 = pneg %p77
      $region18: #{_traced_forward.4} parent=11 // pred_check_branch
        %123 = sbr.rel (%p121) target = $region20
      $region19: #{_traced_forward.4} parent=11 // pred_region
        _
      $region20: #{_traced_forward.4} parent=11 // pred_fallthru
        _
    $region12: #{_traced_forward.4} parent=5 // pred_fallthru
      _
    %p124 = scmp.lt.s32.totalorder %s9, 2
    // Predicated region
    $region21: #{_traced_forward.4} parent=5 // pred_check
      %p125 = pneg %p124
    $region22: #{_traced_forward.4} parent=5 // pred_check_branch
      %127 = sbr.rel (%p125) target = $region24
    $region23: #{_traced_forward.4} parent=5 // pred_region
      // Predicated region
      $region25: #{_traced_forward.4} parent=23 // pred_check
        %p128 = pneg %p29
      $region26: #{_traced_forward.4} parent=23 // pred_check_branch
        %130 = sbr.rel (%p128) target = $region28
      $region27: #{_traced_forward.4} parent=23 // pred_region
        %s131 = smul.u32 8, %s9
        %p132 = scmp.lt.s32.totalorder %s131, 15
        %s133 = scalar_select %p132, %s131, 15
        %s134 = smul.addr %s133, 9
        %s135 = smul.addr %s134, 4
        %s136 = scalar_lea.vmem %s0, %s135
        %s137 = smul.u32 8, %s9
      $region28: #{_traced_forward.4} parent=23 // pred_fallthru
        _
    $region24: #{_traced_forward.4} parent=5 // pred_fallthru
      _
    %p138 = scmp.le.s32.totalorder 1, %s9
    %p139 = scmp.lt.s32.totalorder %s9, 3
    %p140 = pnand %p138, %p139
    %p141 = pneg %p140
    // Predicated region
    $region29: #{_traced_forward.4} parent=5 // pred_check
      _
    $region30: #{_traced_forward.4} parent=5 // pred_check_branch
      %143 = sbr.rel (%p140) target = $region32
    $region31: #{_traced_forward.4} parent=5 // pred_region
      %s144 = ssub.s32 %s9, 1
      %s145 = smul.u32 8, %s14
      %p146 = scmp.lt.s32.totalorder %s145, 15
      %s147 = scalar_select %p146, %s145, 15
      %s148 = smul.addr %s147, 9
      %s149 = smul.addr %s148, 4
      %s150 = scalar_lea.vmem %s0, %s149
      %p151 = pneg %p35
      %p152 = pneg %p32
      %p153 = pneg %p56
      %p154 = pneg %p53
      %p155 = pneg %p77
      %p156 = pneg %p74
      %p157 = pneg %p103
      %p158 = pneg %p100
      %s159 = smul.u32 8, %s14
      %p160 = scmp.lt.s32.totalorder %s159, 15
      %s161 = scalar_select %p160, %s159, 15
      %s162 = smul.addr %s161, 4
      %s163 = scalar_lea.vmem %s3, %s162
      %s164 = smul.u32 8, %s14
      %p165 = scmp.lt.s32.totalorder %s164, 15
      %s166 = scalar_select %p165, %s164, 15
      %s167 = smul.addr %s166, 9
      %s168 = smul.addr %s167, 4
      %s169 = scalar_lea.vmem %s0, %s168
      %s170 = smul.u32 8, %s14
      %s171 = smul.u32 8, %s14
      %p172 = scmp.lt.s32.totalorder %s171, 15
      %s173 = scalar_select %p172, %s171, 15
      %s174 = smul.addr %s173, 4
      %s175 = scalar_lea.vmem %s3, %s174
      %s176 = smul.u32 8, %s14
      %v177 = vld [vmem:[%s169] sm:$0xff]
      %v178 = vld [vmem:[%s169 + $0x8] sm:$0xff]
      %v179 = vld [vmem:[%s169 + $0x10] sm:$0xff]
      %v180 = vld [vmem:[%s169 + $0x18] sm:$0xff]
      %v181 = vld [vmem:[%s169 + $0x20] sm:$0xf]
      %v182 = vld [vmem:[%s169 + $0x24] sm:$0xff]
      %v183 = vld [vmem:[%s169 + $0x2c] sm:$0xff]
      %v184 = vld [vmem:[%s169 + $0x34] sm:$0xff]
      %v185 = vld [vmem:[%s169 + $0x3c] sm:$0xff]
      %v186 = vld [vmem:[%s169 + $0x44] sm:$0xf]
      %v187 = vld [vmem:[%s169 + $0x48] sm:$0xff]
      %v188 = vld [vmem:[%s169 + $0x50] sm:$0xff]
      %v189 = vld [vmem:[%s169 + $0x58] sm:$0xff]
      %v190 = vld [vmem:[%s169 + $0x60] sm:$0xff]
      %v191 = vld [vmem:[%s169 + $0x68] sm:$0xf]
      %v192 = vld [vmem:[%s169 + $0x6c] sm:$0xff]
      %v193 = vld [vmem:[%s169 + $0x74] sm:$0xff]
      %v194 = vld [vmem:[%s169 + $0x7c] sm:$0xff]
      %v195 = vld [vmem:[%s169 + $0x84] sm:$0xff]
      %v196 = vld [vmem:[%s169 + $0x8c] sm:$0xf]
      %v197 = vld [vmem:[%s169 + $0x90] sm:$0xff]
      %v198 = vld [vmem:[%s169 + $0x98] sm:$0xff]
      %v199 = vld [vmem:[%s169 + $0xa0] sm:$0xff]
      %v200 = vld [vmem:[%s169 + $0xa8] sm:$0xff]
      %v201 = vld [vmem:[%s169 + $0xb0] sm:$0xf]
      %v202 = vld [vmem:[%s169 + $0xb4] sm:$0xff]
      %v203 = vld [vmem:[%s169 + $0xbc] sm:$0xff]
      %v204 = vld [vmem:[%s169 + $0xc4] sm:$0xff]
      %v205 = vld [vmem:[%s169 + $0xcc] sm:$0xff]
      %v206 = vld [vmem:[%s169 + $0xd4] sm:$0xf]
      %v207 = vld [vmem:[%s169 + $0xd8] sm:$0xff]
      %v208 = vld [vmem:[%s169 + $0xe0] sm:$0xff]
      %v209 = vld [vmem:[%s169 + $0xe8] sm:$0xff]
      %v210 = vld [vmem:[%s169 + $0xf0] sm:$0xff]
      %v211 = vld [vmem:[%s169 + $0xf8] sm:$0xf]
      %v212 = vld [vmem:[%s169 + $0xfc] sm:$0xff]
      %v213 = vld [vmem:[%s169 + $0x104] sm:$0xff]
      %v214 = vld [vmem:[%s169 + $0x10c] sm:$0xff]
      %v215 = vld [vmem:[%s169 + $0x114] sm:$0xff]
      %v216 = vld [vmem:[%s169 + $0x11c] sm:$0xf]
      %v217 = vld [vmem:[%s1] sm:$0xf]
      %v218 = vld [vmem:[%s1 + $0x4] sm:$0xf]
      %v219 = vld [vmem:[%s1 + $0x8] sm:$0xf]
      %v220 = vld [vmem:[%s1 + $0xc] sm:$0xf]
      %v221 = vld [vmem:[%s1 + $0x10] sm:$0xf]
      %v222 = vld [vmem:[%s1 + $0x14] sm:$0xf]
      %v223 = vld [vmem:[%s1 + $0x18] sm:$0xf]
      %v224 = vld [vmem:[%s1 + $0x1c] sm:$0xf]
      %v225 = vld [vmem:[%s1 + $0x20] sm:$0xf]
      %v226 = vld [vmem:[%s1 + $0x24] sm:$0xf]
      %v227 = vld [vmem:[%s1 + $0x28] sm:$0xf]
      %v228 = vld [vmem:[%s1 + $0x2c] sm:$0xf]
      %v229 = vld [vmem:[%s1 + $0x30] sm:$0xf]
      %v230 = vld [vmem:[%s1 + $0x34] sm:$0xf]
      %v231 = vld [vmem:[%s1 + $0x38] sm:$0xf]
      %v232 = vld [vmem:[%s1 + $0x3c] sm:$0xf]
      %v233 = vld [vmem:[%s1 + $0x40] sm:$0xf]
      %v234 = vld [vmem:[%s1 + $0x44] sm:$0xf]
      %v235 = vld [vmem:[%s1 + $0x48] sm:$0xf]
      %v236 = vld [vmem:[%s1 + $0x4c] sm:$0xf]
      %v237 = vld [vmem:[%s1 + $0x50] sm:$0xf]
      %v238 = vld [vmem:[%s1 + $0x54] sm:$0xf]
      %v239 = vld [vmem:[%s1 + $0x58] sm:$0xf]
      %v240 = vld [vmem:[%s1 + $0x5c] sm:$0xf]
      %v241 = vld [vmem:[%s1 + $0x60] sm:$0xf]
      %v242 = vld [vmem:[%s1 + $0x64] sm:$0xf]
      %v243 = vld [vmem:[%s1 + $0x68] sm:$0xf]
      %v244 = vld [vmem:[%s1 + $0x6c] sm:$0xf]
      %v245 = vld [vmem:[%s1 + $0x70] sm:$0xf]
      %v246 = vld [vmem:[%s1 + $0x74] sm:$0xf]
      %v247 = vld [vmem:[%s1 + $0x78] sm:$0xf]
      %v248 = vld [vmem:[%s1 + $0x7c] sm:$0xf]
      %v249 = vld [vmem:[%s1 + $0x80] sm:$0xf]
      %v250 = vld [vmem:[%s1 + $0x84] sm:$0xf]
      %v251 = vld [vmem:[%s1 + $0x88] sm:$0xf]
      %v252 = vld [vmem:[%s1 + $0x8c] sm:$0xf]
      %v253 = vld [vmem:[%s1 + $0x90] sm:$0xf]
      %v254 = vld [vmem:[%s1 + $0x94] sm:$0xf]
      %v255 = vld [vmem:[%s1 + $0x98] sm:$0xf]
      %v256 = vld [vmem:[%s1 + $0x9c] sm:$0xf]
      %v257 = vld [vmem:[%s1 + $0xa0] sm:$0xf]
      %v258 = vld [vmem:[%s1 + $0xa4] sm:$0xf]
      %v259 = vld [vmem:[%s1 + $0xa8] sm:$0xf]
      %v260 = vld [vmem:[%s1 + $0xac] sm:$0xf]
      %v261 = vld [vmem:[%s1 + $0xb0] sm:$0xf]
      %v262 = vld [vmem:[%s1 + $0xb4] sm:$0xf]
      %v263 = vld [vmem:[%s1 + $0xb8] sm:$0xf]
      %v264 = vld [vmem:[%s1 + $0xbc] sm:$0xf]
      %v265 = vld [vmem:[%s1 + $0xc0] sm:$0xf]
      %v266 = vld [vmem:[%s1 + $0xc4] sm:$0xf]
      %v267 = vld [vmem:[%s1 + $0xc8] sm:$0xf]
      %v268 = vld [vmem:[%s1 + $0xcc] sm:$0xf]
      %v269 = vld [vmem:[%s1 + $0xd0] sm:$0xf]
      %v270 = vld [vmem:[%s1 + $0xd4] sm:$0xf]
      %v271 = vld [vmem:[%s1 + $0xd8] sm:$0xf]
      %v272 = vld [vmem:[%s1 + $0xdc] sm:$0xf]
      %v273 = vld [vmem:[%s1 + $0xe0] sm:$0xf]
      %v274 = vld [vmem:[%s1 + $0xe4] sm:$0xf]
      %v275 = vld [vmem:[%s1 + $0xe8] sm:$0xf]
      %v276 = vld [vmem:[%s1 + $0xec] sm:$0xf]
      %v277 = vld [vmem:[%s1 + $0xf0] sm:$0xf]
      %v278 = vld [vmem:[%s1 + $0xf4] sm:$0xf]
      %v279 = vld [vmem:[%s1 + $0xf8] sm:$0xf]
      %v280 = vld [vmem:[%s1 + $0xfc] sm:$0xf]
      %v281 = vld [vmem:[%s1 + $0x100] sm:$0xf]
      %v282 = vld [vmem:[%s1 + $0x104] sm:$0xf]
      %v283 = vld [vmem:[%s1 + $0x108] sm:$0xf]
      %v284 = vld [vmem:[%s1 + $0x10c] sm:$0xf]
      %v285 = vld [vmem:[%s1 + $0x110] sm:$0xf]
      %v286 = vld [vmem:[%s1 + $0x114] sm:$0xf]
      %v287 = vld [vmem:[%s1 + $0x118] sm:$0xf]
      %v288 = vld [vmem:[%s1 + $0x11c] sm:$0xf]
      %v289 = vld [vmem:[%s1 + $0x120] sm:$0xf]
      %v290 = vld [vmem:[%s1 + $0x124] sm:$0xf]
      %v291 = vld [vmem:[%s1 + $0x128] sm:$0xf]
      %v292 = vld [vmem:[%s1 + $0x12c] sm:$0xf]
      %v293 = vld [vmem:[%s1 + $0x130] sm:$0xf]
      %v294 = vld [vmem:[%s1 + $0x134] sm:$0xf]
      %v295 = vld [vmem:[%s1 + $0x138] sm:$0xf]
      %v296 = vld [vmem:[%s1 + $0x13c] sm:$0xf]
      %v297 = vld [vmem:[%s1 + $0x140] sm:$0xf]
      %v298 = vld [vmem:[%s1 + $0x144] sm:$0xf]
      %v299 = vld [vmem:[%s1 + $0x148] sm:$0xf]
      %v300 = vld [vmem:[%s1 + $0x14c] sm:$0xf]
      %v301 = vld [vmem:[%s1 + $0x150] sm:$0xf]
      %v302 = vld [vmem:[%s1 + $0x154] sm:$0xf]
      %v303 = vld [vmem:[%s1 + $0x158] sm:$0xf]
      %v304 = vld [vmem:[%s1 + $0x15c] sm:$0xf]
      %v305 = vld [vmem:[%s1 + $0x160] sm:$0xf]
      %v306 = vld [vmem:[%s1 + $0x164] sm:$0xf]
      %v307 = vld [vmem:[%s1 + $0x168] sm:$0xf]
      %v308 = vld [vmem:[%s1 + $0x16c] sm:$0xf]
      %v309 = vld [vmem:[%s1 + $0x170] sm:$0xf]
      %v310 = vld [vmem:[%s1 + $0x174] sm:$0xf]
      %v311 = vld [vmem:[%s1 + $0x178] sm:$0xf]
      %v312 = vld [vmem:[%s1 + $0x17c] sm:$0xf]
      %v313 = vld [vmem:[%s1 + $0x180] sm:$0xf]
      %v314 = vld [vmem:[%s1 + $0x184] sm:$0xf]
      %v315 = vld [vmem:[%s1 + $0x188] sm:$0xf]
      %v316 = vld [vmem:[%s1 + $0x18c] sm:$0xf]
      %v317 = vld [vmem:[%s1 + $0x190] sm:$0xf]
      %v318 = vld [vmem:[%s1 + $0x194] sm:$0xf]
      %v319 = vld [vmem:[%s1 + $0x198] sm:$0xf]
      %v320 = vld [vmem:[%s1 + $0x19c] sm:$0xf]
      %v321 = vld [vmem:[%s1 + $0x1a0] sm:$0xf]
      %v322 = vld [vmem:[%s1 + $0x1a4] sm:$0xf]
      %v323 = vld [vmem:[%s1 + $0x1a8] sm:$0xf]
      %v324 = vld [vmem:[%s1 + $0x1ac] sm:$0xf]
      %v325 = vld [vmem:[%s1 + $0x1b0] sm:$0xf]
      %v326 = vld [vmem:[%s1 + $0x1b4] sm:$0xf]
      %v327 = vld [vmem:[%s1 + $0x1b8] sm:$0xf]
      %v328 = vld [vmem:[%s1 + $0x1bc] sm:$0xf]
      %v329 = vld [vmem:[%s1 + $0x1c0] sm:$0xf]
      %v330 = vld [vmem:[%s1 + $0x1c4] sm:$0xf]
      %v331 = vld [vmem:[%s1 + $0x1c8] sm:$0xf]
      %v332 = vld [vmem:[%s1 + $0x1cc] sm:$0xf]
      %v333 = vld [vmem:[%s1 + $0x1d0] sm:$0xf]
      %v334 = vld [vmem:[%s1 + $0x1d4] sm:$0xf]
      %v335 = vld [vmem:[%s1 + $0x1d8] sm:$0xf]
      %v336 = vld [vmem:[%s1 + $0x1dc] sm:$0xf]
      %v337 = vld [vmem:[%s1 + $0x1e0] sm:$0xf]
      %v338 = vld [vmem:[%s1 + $0x1e4] sm:$0xf]
      %v339 = vld [vmem:[%s1 + $0x1e8] sm:$0xf]
      %v340 = vld [vmem:[%s1 + $0x1ec] sm:$0xf]
      %v341 = vld [vmem:[%s1 + $0x1f0] sm:$0xf]
      %v342 = vld [vmem:[%s1 + $0x1f4] sm:$0xf]
      %v343 = vld [vmem:[%s1 + $0x1f8] sm:$0xf]
      %v344 = vld [vmem:[%s1 + $0x1fc] sm:$0xf]
      %v345 = vld [vmem:[%s1 + $0x200] sm:$0xf]
      %v346 = vld [vmem:[%s1 + $0x204] sm:$0xf]
      %v347 = vld [vmem:[%s1 + $0x208] sm:$0xf]
      %v348 = vld [vmem:[%s1 + $0x20c] sm:$0xf]
      %v349 = vld [vmem:[%s1 + $0x210] sm:$0xf]
      %v350 = vld [vmem:[%s1 + $0x214] sm:$0xf]
      %v351 = vld [vmem:[%s1 + $0x218] sm:$0xf]
      %v352 = vld [vmem:[%s1 + $0x21c] sm:$0xf]
      %v353 = vld [vmem:[%s1 + $0x220] sm:$0xf]
      %v354 = vld [vmem:[%s1 + $0x224] sm:$0xf]
      %v355 = vld [vmem:[%s1 + $0x228] sm:$0xf]
      %v356 = vld [vmem:[%s1 + $0x22c] sm:$0xf]
      %v357 = vld [vmem:[%s1 + $0x230] sm:$0xf]
      %v358 = vld [vmem:[%s1 + $0x234] sm:$0xf]
      %v359 = vld [vmem:[%s1 + $0x238] sm:$0xf]
      %v360 = vld [vmem:[%s1 + $0x23c] sm:$0xf]
      %v361 = vld [vmem:[%s2] sm:$0x1]
      %v363 = vperm.slane %v361, 0
      %v405 = vunpack.c.l.b16 %v177
      %v406 = vunpack.c.h.b16 %v177
      %v407 = vunpack.c.l.b16 %v178
      %v408 = vunpack.c.h.b16 %v178
      %v409 = vunpack.c.l.b16 %v179
      %v410 = vunpack.c.h.b16 %v179
      %v411 = vunpack.c.l.b16 %v180
      %v412 = vunpack.c.h.b16 %v180
      %v413 = vunpack.c.l.b16 %v181
      %v414 = vunpack.c.l.b16 %v182
      %v415 = vunpack.c.h.b16 %v182
      %v416 = vunpack.c.l.b16 %v183
      %v417 = vunpack.c.h.b16 %v183
      %v418 = vunpack.c.l.b16 %v184
      %v419 = vunpack.c.h.b16 %v184
      %v420 = vunpack.c.l.b16 %v185
      %v421 = vunpack.c.h.b16 %v185
      %v422 = vunpack.c.l.b16 %v186
      %v423 = vunpack.c.l.b16 %v187
      %v424 = vunpack.c.h.b16 %v187
      %v425 = vunpack.c.l.b16 %v188
      %v426 = vunpack.c.h.b16 %v188
      %v427 = vunpack.c.l.b16 %v189
      %v428 = vunpack.c.h.b16 %v189
      %v429 = vunpack.c.l.b16 %v190
      %v430 = vunpack.c.h.b16 %v190
      %v431 = vunpack.c.l.b16 %v191
      %v432 = vunpack.c.l.b16 %v192
      %v433 = vunpack.c.h.b16 %v192
      %v434 = vunpack.c.l.b16 %v193
      %v435 = vunpack.c.h.b16 %v193
      %v436 = vunpack.c.l.b16 %v194
      %v437 = vunpack.c.h.b16 %v194
      %v438 = vunpack.c.l.b16 %v195
      %v439 = vunpack.c.h.b16 %v195
      %v440 = vunpack.c.l.b16 %v196
      %v441 = vunpack.c.l.b16 %v197
      %v442 = vunpack.c.h.b16 %v197
      %v443 = vunpack.c.l.b16 %v198
      %v444 = vunpack.c.h.b16 %v198
      %v445 = vunpack.c.l.b16 %v199
      %v446 = vunpack.c.h.b16 %v199
      %v447 = vunpack.c.l.b16 %v200
      %v448 = vunpack.c.h.b16 %v200
      %v449 = vunpack.c.l.b16 %v201
      %v450 = vunpack.c.l.b16 %v202
      %v451 = vunpack.c.h.b16 %v202
      %v452 = vunpack.c.l.b16 %v203
      %v453 = vunpack.c.h.b16 %v203
      %v454 = vunpack.c.l.b16 %v204
      %v455 = vunpack.c.h.b16 %v204
      %v456 = vunpack.c.l.b16 %v205
      %v457 = vunpack.c.h.b16 %v205
      %v458 = vunpack.c.l.b16 %v206
      %v459 = vunpack.c.l.b16 %v207
      %v460 = vunpack.c.h.b16 %v207
      %v461 = vunpack.c.l.b16 %v208
      %v462 = vunpack.c.h.b16 %v208
      %v463 = vunpack.c.l.b16 %v209
      %v464 = vunpack.c.h.b16 %v209
      %v465 = vunpack.c.l.b16 %v210
      %v466 = vunpack.c.h.b16 %v210
      %v467 = vunpack.c.l.b16 %v211
      %v468 = vunpack.c.l.b16 %v212
      %v469 = vunpack.c.h.b16 %v212
      %v470 = vunpack.c.l.b16 %v213
      %v471 = vunpack.c.h.b16 %v213
      %v472 = vunpack.c.l.b16 %v214
      %v473 = vunpack.c.h.b16 %v214
      %v474 = vunpack.c.l.b16 %v215
      %v475 = vunpack.c.h.b16 %v215
      %v476 = vunpack.c.l.b16 %v216
      %v477 = vpack.c.b16 %v414, %v405
      %v478 = vpack.c.b16 %v415, %v406
      %v479 = vpack.c.b16 %v416, %v407
      %v480 = vpack.c.b16 %v417, %v408
      %v481 = vpack.c.b16 %v418, %v409
      %v482 = vpack.c.b16 %v419, %v410
      %v483 = vpack.c.b16 %v420, %v411
      %v484 = vpack.c.b16 %v421, %v412
      %v485 = vpack.c.b16 %v422, %v413
      %v486 = vpack.c.b16 %v432, %v423
      %v487 = vpack.c.b16 %v433, %v424
      %v488 = vpack.c.b16 %v434, %v425
      %v489 = vpack.c.b16 %v435, %v426
      %v490 = vpack.c.b16 %v436, %v427
      %v491 = vpack.c.b16 %v437, %v428
      %v492 = vpack.c.b16 %v438, %v429
      %v493 = vpack.c.b16 %v439, %v430
      %v494 = vpack.c.b16 %v440, %v431
      %v495 = vpack.c.b16 %v450, %v441
      %v496 = vpack.c.b16 %v451, %v442
      %v497 = vpack.c.b16 %v452, %v443
      %v498 = vpack.c.b16 %v453, %v444
      %v499 = vpack.c.b16 %v454, %v445
      %v500 = vpack.c.b16 %v455, %v446
      %v501 = vpack.c.b16 %v456, %v447
      %v502 = vpack.c.b16 %v457, %v448
      %v503 = vpack.c.b16 %v458, %v449
      %v504 = vpack.c.b16 %v468, %v459
      %v505 = vpack.c.b16 %v469, %v460
      %v506 = vpack.c.b16 %v470, %v461
      %v507 = vpack.c.b16 %v471, %v462
      %v508 = vpack.c.b16 %v472, %v463
      %v509 = vpack.c.b16 %v473, %v464
      %v510 = vpack.c.b16 %v474, %v465
      %v511 = vpack.c.b16 %v475, %v466
      %v512 = vpack.c.b16 %v476, %v467
      %v693 = vunpack.c.l.b16 %v217
      %v694 = vunpack.c.l.b16 %v218
      %v695 = vunpack.c.l.b16 %v219
      %v696 = vunpack.c.l.b16 %v220
      %v697 = vunpack.c.l.b16 %v221
      %v698 = vunpack.c.l.b16 %v222
      %v699 = vunpack.c.l.b16 %v223
      %v700 = vunpack.c.l.b16 %v224
      %v701 = vunpack.c.l.b16 %v225
      %v702 = vunpack.c.l.b16 %v226
      %v703 = vunpack.c.l.b16 %v227
      %v704 = vunpack.c.l.b16 %v228
      %v705 = vunpack.c.l.b16 %v229
      %v706 = vunpack.c.l.b16 %v230
      %v707 = vunpack.c.l.b16 %v231
      %v708 = vunpack.c.l.b16 %v232
      %v709 = vunpack.c.l.b16 %v233
      %v710 = vunpack.c.l.b16 %v234
      %v711 = vunpack.c.l.b16 %v235
      %v712 = vunpack.c.l.b16 %v236
      %v713 = vunpack.c.l.b16 %v237
      %v714 = vunpack.c.l.b16 %v238
      %v715 = vunpack.c.l.b16 %v239
      %v716 = vunpack.c.l.b16 %v240
      %v717 = vunpack.c.l.b16 %v241
      %v718 = vunpack.c.l.b16 %v242
      %v719 = vunpack.c.l.b16 %v243
      %v720 = vunpack.c.l.b16 %v244
      %v721 = vunpack.c.l.b16 %v245
      %v722 = vunpack.c.l.b16 %v246
      %v723 = vunpack.c.l.b16 %v247
      %v724 = vunpack.c.l.b16 %v248
      %v725 = vunpack.c.l.b16 %v249
      %v726 = vunpack.c.l.b16 %v250
      %v727 = vunpack.c.l.b16 %v251
      %v728 = vunpack.c.l.b16 %v252
      %v729 = vunpack.c.l.b16 %v253
      %v730 = vunpack.c.l.b16 %v254
      %v731 = vunpack.c.l.b16 %v255
      %v732 = vunpack.c.l.b16 %v256
      %v733 = vunpack.c.l.b16 %v257
      %v734 = vunpack.c.l.b16 %v258
      %v735 = vunpack.c.l.b16 %v259
      %v736 = vunpack.c.l.b16 %v260
      %v737 = vunpack.c.l.b16 %v261
      %v738 = vunpack.c.l.b16 %v262
      %v739 = vunpack.c.l.b16 %v263
      %v740 = vunpack.c.l.b16 %v264
      %v741 = vunpack.c.l.b16 %v265
      %v742 = vunpack.c.l.b16 %v266
      %v743 = vunpack.c.l.b16 %v267
      %v744 = vunpack.c.l.b16 %v268
      %v745 = vunpack.c.l.b16 %v269
      %v746 = vunpack.c.l.b16 %v270
      %v747 = vunpack.c.l.b16 %v271
      %v748 = vunpack.c.l.b16 %v272
      %v749 = vunpack.c.l.b16 %v273
      %v750 = vunpack.c.l.b16 %v274
      %v751 = vunpack.c.l.b16 %v275
      %v752 = vunpack.c.l.b16 %v276
      %v753 = vunpack.c.l.b16 %v277
      %v754 = vunpack.c.l.b16 %v278
      %v755 = vunpack.c.l.b16 %v279
      %v756 = vunpack.c.l.b16 %v280
      %v757 = vunpack.c.l.b16 %v281
      %v758 = vunpack.c.l.b16 %v282
      %v759 = vunpack.c.l.b16 %v283
      %v760 = vunpack.c.l.b16 %v284
      %v761 = vunpack.c.l.b16 %v285
      %v762 = vunpack.c.l.b16 %v286
      %v763 = vunpack.c.l.b16 %v287
      %v764 = vunpack.c.l.b16 %v288
      %v765 = vunpack.c.l.b16 %v289
      %v766 = vunpack.c.l.b16 %v290
      %v767 = vunpack.c.l.b16 %v291
      %v768 = vunpack.c.l.b16 %v292
      %v769 = vunpack.c.l.b16 %v293
      %v770 = vunpack.c.l.b16 %v294
      %v771 = vunpack.c.l.b16 %v295
      %v772 = vunpack.c.l.b16 %v296
      %v773 = vunpack.c.l.b16 %v297
      %v774 = vunpack.c.l.b16 %v298
      %v775 = vunpack.c.l.b16 %v299
      %v776 = vunpack.c.l.b16 %v300
      %v777 = vunpack.c.l.b16 %v301
      %v778 = vunpack.c.l.b16 %v302
      %v779 = vunpack.c.l.b16 %v303
      %v780 = vunpack.c.l.b16 %v304
      %v781 = vunpack.c.l.b16 %v305
      %v782 = vunpack.c.l.b16 %v306
      %v783 = vunpack.c.l.b16 %v307
      %v784 = vunpack.c.l.b16 %v308
      %v785 = vunpack.c.l.b16 %v309
      %v786 = vunpack.c.l.b16 %v310
      %v787 = vunpack.c.l.b16 %v311
      %v788 = vunpack.c.l.b16 %v312
      %v789 = vunpack.c.l.b16 %v313
      %v790 = vunpack.c.l.b16 %v314
      %v791 = vunpack.c.l.b16 %v315
      %v792 = vunpack.c.l.b16 %v316
      %v793 = vunpack.c.l.b16 %v317
      %v794 = vunpack.c.l.b16 %v318
      %v795 = vunpack.c.l.b16 %v319
      %v796 = vunpack.c.l.b16 %v320
      %v797 = vunpack.c.l.b16 %v321
      %v798 = vunpack.c.l.b16 %v322
      %v799 = vunpack.c.l.b16 %v323
      %v800 = vunpack.c.l.b16 %v324
      %v801 = vunpack.c.l.b16 %v325
      %v802 = vunpack.c.l.b16 %v326
      %v803 = vunpack.c.l.b16 %v327
      %v804 = vunpack.c.l.b16 %v328
      %v805 = vunpack.c.l.b16 %v329
      %v806 = vunpack.c.l.b16 %v330
      %v807 = vunpack.c.l.b16 %v331
      %v808 = vunpack.c.l.b16 %v332
      %v809 = vunpack.c.l.b16 %v333
      %v810 = vunpack.c.l.b16 %v334
      %v811 = vunpack.c.l.b16 %v335
      %v812 = vunpack.c.l.b16 %v336
      %v813 = vunpack.c.l.b16 %v337
      %v814 = vunpack.c.l.b16 %v338
      %v815 = vunpack.c.l.b16 %v339
      %v816 = vunpack.c.l.b16 %v340
      %v817 = vunpack.c.l.b16 %v341
      %v818 = vunpack.c.l.b16 %v342
      %v819 = vunpack.c.l.b16 %v343
      %v820 = vunpack.c.l.b16 %v344
      %v821 = vunpack.c.l.b16 %v345
      %v822 = vunpack.c.l.b16 %v346
      %v823 = vunpack.c.l.b16 %v347
      %v824 = vunpack.c.l.b16 %v348
      %v825 = vunpack.c.l.b16 %v349
      %v826 = vunpack.c.l.b16 %v350
      %v827 = vunpack.c.l.b16 %v351
      %v828 = vunpack.c.l.b16 %v352
      %v829 = vunpack.c.l.b16 %v353
      %v830 = vunpack.c.l.b16 %v354
      %v831 = vunpack.c.l.b16 %v355
      %v832 = vunpack.c.l.b16 %v356
      %v833 = vunpack.c.l.b16 %v357
      %v834 = vunpack.c.l.b16 %v358
      %v835 = vunpack.c.l.b16 %v359
      %v836 = vunpack.c.l.b16 %v360
      %v837 = vpack.c.b16 %v694, %v693
      %v838 = vpack.c.b16 %v696, %v695
      %v839 = vpack.c.b16 %v698, %v697
      %v840 = vpack.c.b16 %v700, %v699
      %v841 = vpack.c.b16 %v702, %v701
      %v842 = vpack.c.b16 %v704, %v703
      %v843 = vpack.c.b16 %v706, %v705
      %v844 = vpack.c.b16 %v708, %v707
      %v845 = vpack.c.b16 %v710, %v709
      %v846 = vpack.c.b16 %v712, %v711
      %v847 = vpack.c.b16 %v714, %v713
      %v848 = vpack.c.b16 %v716, %v715
      %v849 = vpack.c.b16 %v718, %v717
      %v850 = vpack.c.b16 %v720, %v719
      %v851 = vpack.c.b16 %v722, %v721
      %v852 = vpack.c.b16 %v724, %v723
      %v853 = vpack.c.b16 %v726, %v725
      %v854 = vpack.c.b16 %v728, %v727
      %v855 = vpack.c.b16 %v730, %v729
      %v856 = vpack.c.b16 %v732, %v731
      %v857 = vpack.c.b16 %v734, %v733
      %v858 = vpack.c.b16 %v736, %v735
      %v859 = vpack.c.b16 %v738, %v737
      %v860 = vpack.c.b16 %v740, %v739
      %v861 = vpack.c.b16 %v742, %v741
      %v862 = vpack.c.b16 %v744, %v743
      %v863 = vpack.c.b16 %v746, %v745
      %v864 = vpack.c.b16 %v748, %v747
      %v865 = vpack.c.b16 %v750, %v749
      %v866 = vpack.c.b16 %v752, %v751
      %v867 = vpack.c.b16 %v754, %v753
      %v868 = vpack.c.b16 %v756, %v755
      %v869 = vpack.c.b16 %v758, %v757
      %v870 = vpack.c.b16 %v760, %v759
      %v871 = vpack.c.b16 %v762, %v761
      %v872 = vpack.c.b16 %v764, %v763
      %v873 = vpack.c.b16 %v766, %v765
      %v874 = vpack.c.b16 %v768, %v767
      %v875 = vpack.c.b16 %v770, %v769
      %v876 = vpack.c.b16 %v772, %v771
      %v877 = vpack.c.b16 %v774, %v773
      %v878 = vpack.c.b16 %v776, %v775
      %v879 = vpack.c.b16 %v778, %v777
      %v880 = vpack.c.b16 %v780, %v779
      %v881 = vpack.c.b16 %v782, %v781
      %v882 = vpack.c.b16 %v784, %v783
      %v883 = vpack.c.b16 %v786, %v785
      %v884 = vpack.c.b16 %v788, %v787
      %v885 = vpack.c.b16 %v790, %v789
      %v886 = vpack.c.b16 %v792, %v791
      %v887 = vpack.c.b16 %v794, %v793
      %v888 = vpack.c.b16 %v796, %v795
      %v889 = vpack.c.b16 %v798, %v797
      %v890 = vpack.c.b16 %v800, %v799
      %v891 = vpack.c.b16 %v802, %v801
      %v892 = vpack.c.b16 %v804, %v803
      %v893 = vpack.c.b16 %v806, %v805
      %v894 = vpack.c.b16 %v808, %v807
      %v895 = vpack.c.b16 %v810, %v809
      %v896 = vpack.c.b16 %v812, %v811
      %v897 = vpack.c.b16 %v814, %v813
      %v898 = vpack.c.b16 %v816, %v815
      %v899 = vpack.c.b16 %v818, %v817
      %v900 = vpack.c.b16 %v820, %v819
      %v901 = vpack.c.b16 %v822, %v821
      %v902 = vpack.c.b16 %v824, %v823
      %v903 = vpack.c.b16 %v826, %v825
      %v904 = vpack.c.b16 %v828, %v827
      %v905 = vpack.c.b16 %v830, %v829
      %v906 = vpack.c.b16 %v832, %v831
      %v907 = vpack.c.b16 %v834, %v833
      %v908 = vpack.c.b16 %v836, %v835
      %981 = vmatpush.bf16.msra.mxu0 %v844
      %982 = vmatpush.bf16.msra.mxu0 %v843
      %983 = vmatpush.bf16.msra.mxu0 %v842
      %984 = vmatpush.bf16.msra.mxu0 %v841
      %985 = vmatpush.bf16.msra.mxu0 %v840
      %986 = vmatpush.bf16.msra.mxu0 %v839
      %987 = vmatpush.bf16.msra.mxu0 %v838
      %988 = vmatpush.bf16.msra.mxu0 %v837
      %989 = vmatmul.bf16.gmra.mxu0 %v477
      %v990 = vpop.f32.mrf.mxu0
      %v991 = vadd.f32 %v363, %v990
      %v992 = vpop.f32.mrf.mxu0
      %v993 = vadd.f32 %v363, %v992
      %994 = vmatmul.bf16.gmra.mxu0 %v486
      %v995 = vpop.f32.mrf.mxu0
      %v996 = vadd.f32 %v363, %v995
      %v997 = vpop.f32.mrf.mxu0
      %v998 = vadd.f32 %v363, %v997
      %999 = vmatmul.bf16.gmra.mxu0 %v495
      %v1000 = vpop.f32.mrf.mxu0
      %v1001 = vadd.f32 %v363, %v1000
      %v1002 = vpop.f32.mrf.mxu0
      %v1003 = vadd.f32 %v363, %v1002
      %1004 = vmatmul.bf16.gmra.mxu0 %v504
      %v1005 = vpop.f32.mrf.mxu0
      %v1006 = vadd.f32 %v363, %v1005
      %v1007 = vpop.f32.mrf.mxu0
      %v1008 = vadd.f32 %v363, %v1007
      %1009 = vdwg.mxu0
      %1010 = vmatpush.bf16.msra.mxu0 %v852
      %1011 = vmatpush.bf16.msra.mxu0 %v851
      %1012 = vmatpush.bf16.msra.mxu0 %v850
      %1013 = vmatpush.bf16.msra.mxu0 %v849
      %1014 = vmatpush.bf16.msra.mxu0 %v848
      %1015 = vmatpush.bf16.msra.mxu0 %v847
      %1016 = vmatpush.bf16.msra.mxu0 %v846
      %1017 = vmatpush.bf16.msra.mxu0 %v845
      %1018 = vmatmul.bf16.gmra.mxu0 %v478
      %v1019 = vpop.f32.mrf.mxu0
      %v1020 = vadd.f32 %v991, %v1019
      %v1021 = vpop.f32.mrf.mxu0
      %v1022 = vadd.f32 %v993, %v1021
      %1023 = vmatmul.bf16.gmra.mxu0 %v487
      %v1024 = vpop.f32.mrf.mxu0
      %v1025 = vadd.f32 %v996, %v1024
      %v1026 = vpop.f32.mrf.mxu0
      %v1027 = vadd.f32 %v998, %v1026
      %1028 = vmatmul.bf16.gmra.mxu0 %v496
      %v1029 = vpop.f32.mrf.mxu0
      %v1030 = vadd.f32 %v1001, %v1029
      %v1031 = vpop.f32.mrf.mxu0
      %v1032 = vadd.f32 %v1003, %v1031
      %1033 = vmatmul.bf16.gmra.mxu0 %v505
      %v1034 = vpop.f32.mrf.mxu0
      %v1035 = vadd.f32 %v1006, %v1034
      %v1036 = vpop.f32.mrf.mxu0
      %v1037 = vadd.f32 %v1008, %v1036
      %1038 = vdwg.mxu0
      %1039 = vmatpush.bf16.msra.mxu0 %v860
      %1040 = vmatpush.bf16.msra.mxu0 %v859
      %1041 = vmatpush.bf16.msra.mxu0 %v858
      %1042 = vmatpush.bf16.msra.mxu0 %v857
      %1043 = vmatpush.bf16.msra.mxu0 %v856
      %1044 = vmatpush.bf16.msra.mxu0 %v855
      %1045 = vmatpush.bf16.msra.mxu0 %v854
      %1046 = vmatpush.bf16.msra.mxu0 %v853
      %1047 = vmatmul.bf16.gmra.mxu0 %v479
      %v1048 = vpop.f32.mrf.mxu0
      %v1049 = vadd.f32 %v1020, %v1048
      %v1050 = vpop.f32.mrf.mxu0
      %v1051 = vadd.f32 %v1022, %v1050
      %1052 = vmatmul.bf16.gmra.mxu0 %v488
      %v1053 = vpop.f32.mrf.mxu0
      %v1054 = vadd.f32 %v1025, %v1053
      %v1055 = vpop.f32.mrf.mxu0
      %v1056 = vadd.f32 %v1027, %v1055
      %1057 = vmatmul.bf16.gmra.mxu0 %v497
      %v1058 = vpop.f32.mrf.mxu0
      %v1059 = vadd.f32 %v1030, %v1058
      %v1060 = vpop.f32.mrf.mxu0
      %v1061 = vadd.f32 %v1032, %v1060
      %1062 = vmatmul.bf16.gmra.mxu0 %v506
      %v1063 = vpop.f32.mrf.mxu0
      %v1064 = vadd.f32 %v1035, %v1063
      %v1065 = vpop.f32.mrf.mxu0
      %v1066 = vadd.f32 %v1037, %v1065
      %1067 = vdwg.mxu0
      %1068 = vmatpush.bf16.msra.mxu0 %v868
      %1069 = vmatpush.bf16.msra.mxu0 %v867
      %1070 = vmatpush.bf16.msra.mxu0 %v866
      %1071 = vmatpush.bf16.msra.mxu0 %v865
      %1072 = vmatpush.bf16.msra.mxu0 %v864
      %1073 = vmatpush.bf16.msra.mxu0 %v863
      %1074 = vmatpush.bf16.msra.mxu0 %v862
      %1075 = vmatpush.bf16.msra.mxu0 %v861
      %1076 = vmatmul.bf16.gmra.mxu0 %v480
      %v1077 = vpop.f32.mrf.mxu0
      %v1078 = vadd.f32 %v1049, %v1077
      %v1079 = vpop.f32.mrf.mxu0
      %v1080 = vadd.f32 %v1051, %v1079
      %1081 = vmatmul.bf16.gmra.mxu0 %v489
      %v1082 = vpop.f32.mrf.mxu0
      %v1083 = vadd.f32 %v1054, %v1082
      %v1084 = vpop.f32.mrf.mxu0
      %v1085 = vadd.f32 %v1056, %v1084
      %1086 = vmatmul.bf16.gmra.mxu0 %v498
      %v1087 = vpop.f32.mrf.mxu0
      %v1088 = vadd.f32 %v1059, %v1087
      %v1089 = vpop.f32.mrf.mxu0
      %v1090 = vadd.f32 %v1061, %v1089
      %1091 = vmatmul.bf16.gmra.mxu0 %v507
      %v1092 = vpop.f32.mrf.mxu0
      %v1093 = vadd.f32 %v1064, %v1092
      %v1094 = vpop.f32.mrf.mxu0
      %v1095 = vadd.f32 %v1066, %v1094
      %1096 = vdwg.mxu0
      %1097 = vmatpush.bf16.msra.mxu0 %v876
      %1098 = vmatpush.bf16.msra.mxu0 %v875
      %1099 = vmatpush.bf16.msra.mxu0 %v874
      %1100 = vmatpush.bf16.msra.mxu0 %v873
      %1101 = vmatpush.bf16.msra.mxu0 %v872
      %1102 = vmatpush.bf16.msra.mxu0 %v871
      %1103 = vmatpush.bf16.msra.mxu0 %v870
      %1104 = vmatpush.bf16.msra.mxu0 %v869
      %1105 = vmatmul.bf16.gmra.mxu0 %v481
      %v1106 = vpop.f32.mrf.mxu0
      %v1107 = vadd.f32 %v1078, %v1106
      %v1108 = vpop.f32.mrf.mxu0
      %v1109 = vadd.f32 %v1080, %v1108
      %1110 = vmatmul.bf16.gmra.mxu0 %v490
      %v1111 = vpop.f32.mrf.mxu0
      %v1112 = vadd.f32 %v1083, %v1111
      %v1113 = vpop.f32.mrf.mxu0
      %v1114 = vadd.f32 %v1085, %v1113
      %1115 = vmatmul.bf16.gmra.mxu0 %v499
      %v1116 = vpop.f32.mrf.mxu0
      %v1117 = vadd.f32 %v1088, %v1116
      %v1118 = vpop.f32.mrf.mxu0
      %v1119 = vadd.f32 %v1090, %v1118
      %1120 = vmatmul.bf16.gmra.mxu0 %v508
      %v1121 = vpop.f32.mrf.mxu0
      %v1122 = vadd.f32 %v1093, %v1121
      %v1123 = vpop.f32.mrf.mxu0
      %v1124 = vadd.f32 %v1095, %v1123
      %1125 = vdwg.mxu0
      %1126 = vmatpush.bf16.msra.mxu0 %v884
      %1127 = vmatpush.bf16.msra.mxu0 %v883
      %1128 = vmatpush.bf16.msra.mxu0 %v882
      %1129 = vmatpush.bf16.msra.mxu0 %v881
      %1130 = vmatpush.bf16.msra.mxu0 %v880
      %1131 = vmatpush.bf16.msra.mxu0 %v879
      %1132 = vmatpush.bf16.msra.mxu0 %v878
      %1133 = vmatpush.bf16.msra.mxu0 %v877
      %1134 = vmatmul.bf16.gmra.mxu0 %v482
      %v1135 = vpop.f32.mrf.mxu0
      %v1136 = vadd.f32 %v1107, %v1135
      %v1137 = vpop.f32.mrf.mxu0
      %v1138 = vadd.f32 %v1109, %v1137
      %1139 = vmatmul.bf16.gmra.mxu0 %v491
      %v1140 = vpop.f32.mrf.mxu0
      %v1141 = vadd.f32 %v1112, %v1140
      %v1142 = vpop.f32.mrf.mxu0
      %v1143 = vadd.f32 %v1114, %v1142
      %1144 = vmatmul.bf16.gmra.mxu0 %v500
      %v1145 = vpop.f32.mrf.mxu0
      %v1146 = vadd.f32 %v1117, %v1145
      %v1147 = vpop.f32.mrf.mxu0
      %v1148 = vadd.f32 %v1119, %v1147
      %1149 = vmatmul.bf16.gmra.mxu0 %v509
      %v1150 = vpop.f32.mrf.mxu0
      %v1151 = vadd.f32 %v1122, %v1150
      %v1152 = vpop.f32.mrf.mxu0
      %v1153 = vadd.f32 %v1124, %v1152
      %1154 = vdwg.mxu0
      %1155 = vmatpush.bf16.msra.mxu0 %v892
      %1156 = vmatpush.bf16.msra.mxu0 %v891
      %1157 = vmatpush.bf16.msra.mxu0 %v890
      %1158 = vmatpush.bf16.msra.mxu0 %v889
      %1159 = vmatpush.bf16.msra.mxu0 %v888
      %1160 = vmatpush.bf16.msra.mxu0 %v887
      %1161 = vmatpush.bf16.msra.mxu0 %v886
      %1162 = vmatpush.bf16.msra.mxu0 %v885
      %1163 = vmatmul.bf16.gmra.mxu0 %v483
      %v1164 = vpop.f32.mrf.mxu0
      %v1165 = vadd.f32 %v1136, %v1164
      %v1166 = vpop.f32.mrf.mxu0
      %v1167 = vadd.f32 %v1138, %v1166
      %1168 = vmatmul.bf16.gmra.mxu0 %v492
      %v1169 = vpop.f32.mrf.mxu0
      %v1170 = vadd.f32 %v1141, %v1169
      %v1171 = vpop.f32.mrf.mxu0
      %v1172 = vadd.f32 %v1143, %v1171
      %1173 = vmatmul.bf16.gmra.mxu0 %v501
      %v1174 = vpop.f32.mrf.mxu0
      %v1175 = vadd.f32 %v1146, %v1174
      %v1176 = vpop.f32.mrf.mxu0
      %v1177 = vadd.f32 %v1148, %v1176
      %1178 = vmatmul.bf16.gmra.mxu0 %v510
      %v1179 = vpop.f32.mrf.mxu0
      %v1180 = vadd.f32 %v1151, %v1179
      %v1181 = vpop.f32.mrf.mxu0
      %v1182 = vadd.f32 %v1153, %v1181
      %1183 = vdwg.mxu0
      %1184 = vmatpush.bf16.msra.mxu0 %v900
      %1185 = vmatpush.bf16.msra.mxu0 %v899
      %1186 = vmatpush.bf16.msra.mxu0 %v898
      %1187 = vmatpush.bf16.msra.mxu0 %v897
      %1188 = vmatpush.bf16.msra.mxu0 %v896
      %1189 = vmatpush.bf16.msra.mxu0 %v895
      %1190 = vmatpush.bf16.msra.mxu0 %v894
      %1191 = vmatpush.bf16.msra.mxu0 %v893
      %1192 = vmatmul.bf16.gmra.mxu0 %v484
      %v1193 = vpop.f32.mrf.mxu0
      %v1194 = vadd.f32 %v1165, %v1193
      %v1195 = vpop.f32.mrf.mxu0
      %v1196 = vadd.f32 %v1167, %v1195
      %1197 = vmatmul.bf16.gmra.mxu0 %v493
      %v1198 = vpop.f32.mrf.mxu0
      %v1199 = vadd.f32 %v1170, %v1198
      %v1200 = vpop.f32.mrf.mxu0
      %v1201 = vadd.f32 %v1172, %v1200
      %1202 = vmatmul.bf16.gmra.mxu0 %v502
      %v1203 = vpop.f32.mrf.mxu0
      %v1204 = vadd.f32 %v1175, %v1203
      %v1205 = vpop.f32.mrf.mxu0
      %v1206 = vadd.f32 %v1177, %v1205
      %1207 = vmatmul.bf16.gmra.mxu0 %v511
      %v1208 = vpop.f32.mrf.mxu0
      %v1209 = vadd.f32 %v1180, %v1208
      %v1210 = vpop.f32.mrf.mxu0
      %v1211 = vadd.f32 %v1182, %v1210
      %1212 = vdwg.mxu0
      %1213 = vmatpush.bf16.msra.mxu0 %v908
      %1214 = vmatpush.bf16.msra.mxu0 %v907
      %1215 = vmatpush.bf16.msra.mxu0 %v906
      %1216 = vmatpush.bf16.msra.mxu0 %v905
      %1217 = vmatpush.bf16.msra.mxu0 %v904
      %1218 = vmatpush.bf16.msra.mxu0 %v903
      %1219 = vmatpush.bf16.msra.mxu0 %v902
      %1220 = vmatpush.bf16.msra.mxu0 %v901
      %1221 = vmatmul.bf16.gmra.mxu0 %v485
      %v1222 = vpop.f32.mrf.mxu0
      %v1223 = vadd.f32 %v1194, %v1222
      %v1224 = vpop.f32.mrf.mxu0
      %v1225 = vadd.f32 %v1196, %v1224
      %1226 = vmatmul.bf16.gmra.mxu0 %v494
      %v1227 = vpop.f32.mrf.mxu0
      %v1228 = vadd.f32 %v1199, %v1227
      %v1229 = vpop.f32.mrf.mxu0
      %v1230 = vadd.f32 %v1201, %v1229
      %1231 = vmatmul.bf16.gmra.mxu0 %v503
      %v1232 = vpop.f32.mrf.mxu0
      %v1233 = vadd.f32 %v1204, %v1232
      %v1234 = vpop.f32.mrf.mxu0
      %v1235 = vadd.f32 %v1206, %v1234
      %1236 = vmatmul.bf16.gmra.mxu0 %v512
      %v1237 = vpop.f32.mrf.mxu0
      %v1238 = vadd.f32 %v1209, %v1237
      %v1239 = vpop.f32.mrf.mxu0
      %v1240 = vadd.f32 %v1211, %v1239
      %1241 = vdwg.mxu0
      %v1242 = vpack.c.bf16 %v1223, %v1223
      %v1243 = vpack.c.bf16 %v1225, %v1225
      %v1244 = vpack.c.bf16 %v1228, %v1228
      %v1245 = vpack.c.bf16 %v1230, %v1230
      %v1246 = vpack.c.bf16 %v1233, %v1233
      %v1247 = vpack.c.bf16 %v1235, %v1235
      %v1248 = vpack.c.bf16 %v1238, %v1238
      %v1249 = vpack.c.bf16 %v1240, %v1240
      %1250 = vst [vmem:[%s175] sm:$0xf] %v1242
      %1251 = vst [vmem:[%s175 + $0x4] sm:$0xf] %v1243
      %1252 = vst [vmem:[%s175 + $0x8] sm:$0xf] %v1244
      %1253 = vst [vmem:[%s175 + $0xc] sm:$0xf] %v1245
      %1254 = vst [vmem:[%s175 + $0x10] sm:$0xf] %v1246
      %1255 = vst [vmem:[%s175 + $0x14] sm:$0xf] %v1247
      %1256 = vst [vmem:[%s175 + $0x18] sm:$0xf] %v1248
      %1257 = vst [vmem:[%s175 + $0x1c] sm:$0xf] %v1249
      %s1258 = smul.u32 8, %s14
      %p1259 = scmp.lt.s32.totalorder %s1258, 15
      %s1260 = scalar_select %p1259, %s1258, 15
      %s1261 = smul.addr %s1260, 4
      %s1262 = scalar_lea.vmem %s3, %s1261
      // Predicated region
      $region33: #{_traced_forward.4} parent=31 // pred_check
        %p1263 = pneg %p100
      $region34: #{_traced_forward.4} parent=31 // pred_check_branch
        %1265 = sbr.rel (%p1263) target = $region36
      $region35: #{_traced_forward.4} parent=31 // pred_region
        %s1266 = smul.u32 8, %s14
      $region36: #{_traced_forward.4} parent=31 // pred_fallthru
        _
    $region32: #{_traced_forward.4} parent=5 // pred_fallthru
      _
    %p1267 = scmp.le.s32.totalorder 2, %s9
    // Predicated region
    $region37: #{_traced_forward.4} parent=5 // pred_check
      %p1268 = pneg %p1267
    $region38: #{_traced_forward.4} parent=5 // pred_check_branch
      %1270 = sbr.rel (%p1268) target = $region40
    $region39: #{_traced_forward.4} parent=5 // pred_region
      %s1271 = ssub.s32 %s9, 2
      // Predicated region
      $region41: #{_traced_forward.4} parent=39 // pred_check
        %p1272 = pneg %p106
      $region42: #{_traced_forward.4} parent=39 // pred_check_branch
        %1274 = sbr.rel (%p1272) target = $region44
      $region43: #{_traced_forward.4} parent=39 // pred_region
        %s1275 = smul.u32 8, %s15
        %p1276 = scmp.lt.s32.totalorder %s1275, 15
        %s1277 = scalar_select %p1276, %s1275, 15
        %s1278 = smul.addr %s1277, 4
        %s1279 = scalar_lea.vmem %s3, %s1278
      $region44: #{_traced_forward.4} parent=39 // pred_fallthru
        _
    $region40: #{_traced_forward.4} parent=5 // pred_fallthru
      _
  $region6: #{_traced_forward.4} parent=0 // loop_footer
    %s13 = sadd.s32 1, %s9
  $region7: #{_traced_forward.4} parent=0 // loop_footer_branch
    %8 = sbr.rel target = $region3
  $region8: #{_traced_forward.4} parent=0 // loop_exit
    _

</llo_original>
